<compile_context>
chip_gen: v6e
topology: v6e:2x2x1
jax: 0.10.0
libtpu: 0.0.40
codegen_flags: <defaults>
</compile_context>

<pallas_src>
import functools

import jax
import jax.numpy as jnp
from jax.experimental import pallas as pl
from jax.experimental.pallas import tpu as pltpu


def dilated_conv_kernel(x_ref, w_ref, o_ref, *, k, d, stride, Ho, Wo, Hf, Wp,
                        L_out):
    # x_ref: (1, Cin, FLAT) flattened padded activation (row pitch = Wp)
    # w_ref: (k*k, Cout, Cin) per-tap weights
    # o_ref: (1, Cout, L_out) lane-dense output slab
    cout = w_ref.shape[1]
    L = Hf * Wp  # full-resolution (stride-1) output lanes, virtual width Wp

    acc = jnp.zeros((cout, L), dtype=jnp.float32)
    t = 0
    for kh in range(k):
        for kw in range(k):
            off = kh * d * Wp + kw * d
            # Lane-contiguous tap slice: column p = hf*Wp + wf of `patch` is
            # x_pad[:, hf + kh*d, wf + kw*d] (wrap-around columns are garbage
            # and are discarded below).
            patch = x_ref[0, :, off:off + L]            # (Cin, L)
            w_t = w_ref[t]                              # (Cout, Cin)
            acc = acc + jnp.dot(w_t, patch,
                                preferred_element_type=jnp.float32)
            t += 1

    # One output-side compaction on the small (Cout, ...) accumulator:
    # strip pad columns and (for stride>1) subsample rows/cols.
    out = acc.reshape(cout, Hf, Wp)
    if stride > 1:
        out = out.reshape(cout, Ho, stride, Wp)[:, :, 0, :]   # row decimation
    out = out[:, :, :Wo * stride]
    if stride > 1:
        out = out.reshape(cout, Ho, Wo, stride)[:, :, :, 0]   # col decimation
    out = out.reshape(cout, Ho * Wo)

    # Lane-density guard: pad the stored lane extent up to a multiple of 128
    # so the store is always an unmasked, lane-dense vst.
    if L_out != Ho * Wo:
        out = jnp.concatenate(
            [out, jnp.zeros((cout, L_out - Ho * Wo), dtype=out.dtype)], axis=1)

    o_ref[0] = out.astype(o_ref.dtype)                       # one store


def dilated_conv(x_nchw, w_oihw, *, stride=1, d=1, compute_dtype=None):
    """Forward of DilatedConv: Conv2d(nIn, nOut, k, stride, pad=((k-1)//2)*d,
    bias=False, dilation=d). Input NCHW, weight OIHW, output NCHW."""
    N, Cin, H, W = x_nchw.shape
    Cout, Cin_w, kH, kW = w_oihw.shape
    assert Cin == Cin_w and kH == kW
    k = kH
    s = stride
    pad = ((k - 1) // 2) * d
    Ho = (H + 2 * pad - d * (k - 1) - 1) // s + 1
    Wo = (W + 2 * pad - d * (k - 1) - 1) // s + 1

    # Full-resolution (stride-1) extents computed in-kernel before decimation.
    Hf, Wf = Ho * s, Wo * s
    # Row pitch of the flattened padded activation.
    Wp = max(W + 2 * pad, Wf)
    # Flat length needed so every tap's contiguous slice stays in bounds.
    flat_needed = (k - 1) * d * (Wp + 1) + Hf * Wp
    Hp_tot = max(H + 2 * pad, -(-flat_needed // Wp))
    right = Wp - (W + pad)
    bottom = Hp_tot - (H + pad)
    FLAT = Hp_tot * Wp

    out_dtype = x_nchw.dtype
    if compute_dtype is not None:
        x_nchw = x_nchw.astype(compute_dtype)
        w_oihw = w_oihw.astype(compute_dtype)

    # Single wrapper-side activation pass: spatial zero-pad, still NCHW,
    # then a free (row-major) flatten of the spatial dims.
    x_pad = jnp.pad(x_nchw, ((0, 0), (0, 0), (pad, bottom), (pad, right)))
    x_flat = x_pad.reshape(N, Cin, FLAT)

    # Weight OIHW -> (k*k, Cout, Cin), tap-major. Tiny tensor; negligible cost.
    w_taps = jnp.transpose(w_oihw, (2, 3, 0, 1)).reshape(k * k, Cout, Cin)

    # Lane-dense output extent (multiple of 128).
    L_out = ((Ho * Wo + 127) // 128) * 128

    kernel = functools.partial(dilated_conv_kernel, k=k, d=d, stride=s,
                               Ho=Ho, Wo=Wo, Hf=Hf, Wp=Wp, L_out=L_out)

    out = pl.pallas_call(
        kernel,
        out_shape=jax.ShapeDtypeStruct((N, Cout, L_out), out_dtype),
        grid_spec=pltpu.PrefetchScalarGridSpec(
            num_scalar_prefetch=0,
            grid=(N,),
            in_specs=[
                pl.BlockSpec((1, Cin, FLAT), lambda n: (n, 0, 0)),
                # Grid-invariant index_map -> weights stay VMEM resident.
                pl.BlockSpec((k * k, Cout, Cin), lambda n: (0, 0, 0)),
            ],
            out_specs=pl.BlockSpec((1, Cout, L_out), lambda n: (n, 0, 0)),
        ),
        compiler_params=pltpu.CompilerParams(
            dimension_semantics=("parallel",)),
    )(x_flat, w_taps)

    # Strip the lane-density tail (no-op when Ho*Wo is already a multiple of
    # 128) and restore NCHW.  (N, Cout, Ho*Wo) is contiguous -> free reshape.
    return out[:, :, :Ho * Wo].reshape(N, Cout, Ho, Wo)


def _reference(x, w, *, stride, d, k):
    pad = ((k - 1) // 2) * d
    return jax.lax.conv_general_dilated(
        x, w, window_strides=(stride, stride),
        padding=((pad, pad), (pad, pad)), rhs_dilation=(d, d),
        dimension_numbers=("NCHW", "OIHW", "NCHW"))


if __name__ == "__main__":
    # DilatedConv(nIn=4, nOut=8, kSize=3, stride=1, d=2) on x: (2, 4, 16, 16)
    nIn, nOut, kSize, d = 4, 8, 3, 2
    N, H, W = 2, 4, 16  # placeholder; real shapes set below
    N, H, W = 2, 16, 16

    key = jax.random.PRNGKey(0)
    kx, kw = jax.random.split(key)
    x = jax.random.normal(kx, (N, nIn, H, W), dtype=jnp.float32)
    # Deterministic weight init (uniform, PyTorch Conv2d weight shape OIHW).
    bound = 1.0 / (nIn * kSize * kSize) ** 0.5
    w = jax.random.uniform(kw, (nOut, nIn, kSize, kSize),
                           minval=-bound, maxval=bound, dtype=jnp.float32)

    # 1) f32, stride=1 (the module's configuration): strict check.
    out = jax.block_until_ready(dilated_conv(x, w, stride=1, d=d))
    ref = _reference(x, w, stride=1, d=d, k=kSize)
    assert out.shape == ref.shape == (N, nOut, H, W)
    assert jnp.allclose(out, ref, atol=1e-4, rtol=1e-4)

    # 2) bf16 compute path (f32 accumulation): loosened tolerance.
    out_bf16 = jax.block_until_ready(
        dilated_conv(x, w, stride=1, d=d, compute_dtype=jnp.bfloat16))
    assert out_bf16.shape == ref.shape
    assert jnp.allclose(out_bf16, ref, atol=5e-2, rtol=5e-2)

    # 3) stride=2 path (per correctness review): strict f32 check.
    out_s2 = jax.block_until_ready(dilated_conv(x, w, stride=2, d=d))
    ref_s2 = _reference(x, w, stride=2, d=d, k=kSize)
    assert out_s2.shape == ref_s2.shape == (N, nOut, 8, 8)
    assert jnp.allclose(out_s2, ref_s2, atol=1e-4, rtol=1e-4)

    print("KERNEL_OK")
</pallas_src>

<mosaic_0001>
module attributes {stable_mosaic.version = 11 : i64} {
  func.func @dilated_conv_kernel(%arg0: i32, %arg1: memref<1x4x420xf32, #tpu.memory_space<vmem>>, %arg2: memref<9x8x4xf32, #tpu.memory_space<vmem>>, %arg3: memref<1x8x256xf32, #tpu.memory_space<vmem>>) attributes {dimension_semantics = [#tpu.dimension_semantics<parallel>], iteration_bounds = array<i64: 2>, scalar_prefetch = 0 : i64, scratch_operands = 0 : i64, tpu.core_type = #tpu.core_type<tc>, window_params = [{transform_indices = @transform_0, window_bounds = array<i64: 1, 4, 420>}, {pipeline_mode = #tpu.pipeline_mode<synchronous>, transform_indices = @transform_1, window_bounds = array<i64: 9, 8, 4>}, {transform_indices = @transform_2, window_bounds = array<i64: 1, 8, 256>}]} {
    %cst = arith.constant 0.000000e+00 : f32
    %0 = vector.broadcast %cst : f32 to vector<8x320xf32>
    %c0 = arith.constant 0 : index
    %c0_0 = arith.constant 0 : index
    %c0_1 = arith.constant 0 : index
    %1 = vector.load %arg1[%c0, %c0_0, %c0_1] : memref<1x4x420xf32, #tpu.memory_space<vmem>>, vector<1x4x320xf32>
    %2 = vector.shape_cast %1 : vector<1x4x320xf32> to vector<4x320xf32>
    %c0_2 = arith.constant 0 : index
    %c0_3 = arith.constant 0 : index
    %c0_4 = arith.constant 0 : index
    %3 = vector.load %arg2[%c0_2, %c0_3, %c0_4] : memref<9x8x4xf32, #tpu.memory_space<vmem>>, vector<1x8x4xf32>
    %4 = vector.shape_cast %3 : vector<1x8x4xf32> to vector<8x4xf32>
    %cst_5 = arith.constant dense<0.000000e+00> : vector<8x320xf32>
    %5 = tpu.matmul %4, %2, %cst_5 {dimension_numbers = #tpu.dot_dimension_numbers<[1], [0], [0], [1], [0, 0, 1, 1], [], []>} : vector<8x4xf32>, vector<4x320xf32>, vector<8x320xf32> -> vector<8x320xf32>
    %6 = arith.addf %0, %5 : vector<8x320xf32>
    %c0_6 = arith.constant 0 : index
    %c0_7 = arith.constant 0 : index
    %c2 = arith.constant 2 : index
    %7 = vector.load %arg1[%c0_6, %c0_7, %c2] : memref<1x4x420xf32, #tpu.memory_space<vmem>>, vector<1x4x320xf32>
    %8 = vector.shape_cast %7 : vector<1x4x320xf32> to vector<4x320xf32>
    %c1 = arith.constant 1 : index
    %c0_8 = arith.constant 0 : index
    %c0_9 = arith.constant 0 : index
    %9 = vector.load %arg2[%c1, %c0_8, %c0_9] : memref<9x8x4xf32, #tpu.memory_space<vmem>>, vector<1x8x4xf32>
    %10 = vector.shape_cast %9 : vector<1x8x4xf32> to vector<8x4xf32>
    %cst_10 = arith.constant dense<0.000000e+00> : vector<8x320xf32>
    %11 = tpu.matmul %10, %8, %cst_10 {dimension_numbers = #tpu.dot_dimension_numbers<[1], [0], [0], [1], [0, 0, 1, 1], [], []>} : vector<8x4xf32>, vector<4x320xf32>, vector<8x320xf32> -> vector<8x320xf32>
    %12 = arith.addf %6, %11 : vector<8x320xf32>
    %c0_11 = arith.constant 0 : index
    %c0_12 = arith.constant 0 : index
    %c4 = arith.constant 4 : index
    %13 = vector.load %arg1[%c0_11, %c0_12, %c4] : memref<1x4x420xf32, #tpu.memory_space<vmem>>, vector<1x4x320xf32>
    %14 = vector.shape_cast %13 : vector<1x4x320xf32> to vector<4x320xf32>
    %c2_13 = arith.constant 2 : index
    %c0_14 = arith.constant 0 : index
    %c0_15 = arith.constant 0 : index
    %15 = vector.load %arg2[%c2_13, %c0_14, %c0_15] : memref<9x8x4xf32, #tpu.memory_space<vmem>>, vector<1x8x4xf32>
    %16 = vector.shape_cast %15 : vector<1x8x4xf32> to vector<8x4xf32>
    %cst_16 = arith.constant dense<0.000000e+00> : vector<8x320xf32>
    %17 = tpu.matmul %16, %14, %cst_16 {dimension_numbers = #tpu.dot_dimension_numbers<[1], [0], [0], [1], [0, 0, 1, 1], [], []>} : vector<8x4xf32>, vector<4x320xf32>, vector<8x320xf32> -> vector<8x320xf32>
    %18 = arith.addf %12, %17 : vector<8x320xf32>
    %c0_17 = arith.constant 0 : index
    %c0_18 = arith.constant 0 : index
    %c40 = arith.constant 40 : index
    %19 = vector.load %arg1[%c0_17, %c0_18, %c40] : memref<1x4x420xf32, #tpu.memory_space<vmem>>, vector<1x4x320xf32>
    %20 = vector.shape_cast %19 : vector<1x4x320xf32> to vector<4x320xf32>
    %c3 = arith.constant 3 : index
    %c0_19 = arith.constant 0 : index
    %c0_20 = arith.constant 0 : index
    %21 = vector.load %arg2[%c3, %c0_19, %c0_20] : memref<9x8x4xf32, #tpu.memory_space<vmem>>, vector<1x8x4xf32>
    %22 = vector.shape_cast %21 : vector<1x8x4xf32> to vector<8x4xf32>
    %cst_21 = arith.constant dense<0.000000e+00> : vector<8x320xf32>
    %23 = tpu.matmul %22, %20, %cst_21 {dimension_numbers = #tpu.dot_dimension_numbers<[1], [0], [0], [1], [0, 0, 1, 1], [], []>} : vector<8x4xf32>, vector<4x320xf32>, vector<8x320xf32> -> vector<8x320xf32>
    %24 = arith.addf %18, %23 : vector<8x320xf32>
    %c0_22 = arith.constant 0 : index
    %c0_23 = arith.constant 0 : index
    %c42 = arith.constant 42 : index
    %25 = vector.load %arg1[%c0_22, %c0_23, %c42] : memref<1x4x420xf32, #tpu.memory_space<vmem>>, vector<1x4x320xf32>
    %26 = vector.shape_cast %25 : vector<1x4x320xf32> to vector<4x320xf32>
    %c4_24 = arith.constant 4 : index
    %c0_25 = arith.constant 0 : index
    %c0_26 = arith.constant 0 : index
    %27 = vector.load %arg2[%c4_24, %c0_25, %c0_26] : memref<9x8x4xf32, #tpu.memory_space<vmem>>, vector<1x8x4xf32>
    %28 = vector.shape_cast %27 : vector<1x8x4xf32> to vector<8x4xf32>
    %cst_27 = arith.constant dense<0.000000e+00> : vector<8x320xf32>
    %29 = tpu.matmul %28, %26, %cst_27 {dimension_numbers = #tpu.dot_dimension_numbers<[1], [0], [0], [1], [0, 0, 1, 1], [], []>} : vector<8x4xf32>, vector<4x320xf32>, vector<8x320xf32> -> vector<8x320xf32>
    %30 = arith.addf %24, %29 : vector<8x320xf32>
    %c0_28 = arith.constant 0 : index
    %c0_29 = arith.constant 0 : index
    %c44 = arith.constant 44 : index
    %31 = vector.load %arg1[%c0_28, %c0_29, %c44] : memref<1x4x420xf32, #tpu.memory_space<vmem>>, vector<1x4x320xf32>
    %32 = vector.shape_cast %31 : vector<1x4x320xf32> to vector<4x320xf32>
    %c5 = arith.constant 5 : index
    %c0_30 = arith.constant 0 : index
    %c0_31 = arith.constant 0 : index
    %33 = vector.load %arg2[%c5, %c0_30, %c0_31] : memref<9x8x4xf32, #tpu.memory_space<vmem>>, vector<1x8x4xf32>
    %34 = vector.shape_cast %33 : vector<1x8x4xf32> to vector<8x4xf32>
    %cst_32 = arith.constant dense<0.000000e+00> : vector<8x320xf32>
    %35 = tpu.matmul %34, %32, %cst_32 {dimension_numbers = #tpu.dot_dimension_numbers<[1], [0], [0], [1], [0, 0, 1, 1], [], []>} : vector<8x4xf32>, vector<4x320xf32>, vector<8x320xf32> -> vector<8x320xf32>
    %36 = arith.addf %30, %35 : vector<8x320xf32>
    %c0_33 = arith.constant 0 : index
    %c0_34 = arith.constant 0 : index
    %c80 = arith.constant 80 : index
    %37 = vector.load %arg1[%c0_33, %c0_34, %c80] : memref<1x4x420xf32, #tpu.memory_space<vmem>>, vector<1x4x320xf32>
    %38 = vector.shape_cast %37 : vector<1x4x320xf32> to vector<4x320xf32>
    %c6 = arith.constant 6 : index
    %c0_35 = arith.constant 0 : index
    %c0_36 = arith.constant 0 : index
    %39 = vector.load %arg2[%c6, %c0_35, %c0_36] : memref<9x8x4xf32, #tpu.memory_space<vmem>>, vector<1x8x4xf32>
    %40 = vector.shape_cast %39 : vector<1x8x4xf32> to vector<8x4xf32>
    %cst_37 = arith.constant dense<0.000000e+00> : vector<8x320xf32>
    %41 = tpu.matmul %40, %38, %cst_37 {dimension_numbers = #tpu.dot_dimension_numbers<[1], [0], [0], [1], [0, 0, 1, 1], [], []>} : vector<8x4xf32>, vector<4x320xf32>, vector<8x320xf32> -> vector<8x320xf32>
    %42 = arith.addf %36, %41 : vector<8x320xf32>
    %c0_38 = arith.constant 0 : index
    %c0_39 = arith.constant 0 : index
    %c82 = arith.constant 82 : index
    %43 = vector.load %arg1[%c0_38, %c0_39, %c82] : memref<1x4x420xf32, #tpu.memory_space<vmem>>, vector<1x4x320xf32>
    %44 = vector.shape_cast %43 : vector<1x4x320xf32> to vector<4x320xf32>
    %c7 = arith.constant 7 : index
    %c0_40 = arith.constant 0 : index
    %c0_41 = arith.constant 0 : index
    %45 = vector.load %arg2[%c7, %c0_40, %c0_41] : memref<9x8x4xf32, #tpu.memory_space<vmem>>, vector<1x8x4xf32>
    %46 = vector.shape_cast %45 : vector<1x8x4xf32> to vector<8x4xf32>
    %cst_42 = arith.constant dense<0.000000e+00> : vector<8x320xf32>
    %47 = tpu.matmul %46, %44, %cst_42 {dimension_numbers = #tpu.dot_dimension_numbers<[1], [0], [0], [1], [0, 0, 1, 1], [], []>} : vector<8x4xf32>, vector<4x320xf32>, vector<8x320xf32> -> vector<8x320xf32>
    %48 = arith.addf %42, %47 : vector<8x320xf32>
    %c0_43 = arith.constant 0 : index
    %c0_44 = arith.constant 0 : index
    %c84 = arith.constant 84 : index
    %49 = vector.load %arg1[%c0_43, %c0_44, %c84] : memref<1x4x420xf32, #tpu.memory_space<vmem>>, vector<1x4x320xf32>
    %50 = vector.shape_cast %49 : vector<1x4x320xf32> to vector<4x320xf32>
    %c8 = arith.constant 8 : index
    %c0_45 = arith.constant 0 : index
    %c0_46 = arith.constant 0 : index
    %51 = vector.load %arg2[%c8, %c0_45, %c0_46] : memref<9x8x4xf32, #tpu.memory_space<vmem>>, vector<1x8x4xf32>
    %52 = vector.shape_cast %51 : vector<1x8x4xf32> to vector<8x4xf32>
    %cst_47 = arith.constant dense<0.000000e+00> : vector<8x320xf32>
    %53 = tpu.matmul %52, %50, %cst_47 {dimension_numbers = #tpu.dot_dimension_numbers<[1], [0], [0], [1], [0, 0, 1, 1], [], []>} : vector<8x4xf32>, vector<4x320xf32>, vector<8x320xf32> -> vector<8x320xf32>
    %54 = arith.addf %48, %53 : vector<8x320xf32>
    %55 = vector.shape_cast %54 : vector<8x320xf32> to vector<8x16x20xf32>
    %56 = vector.extract_strided_slice %55 {offsets = [0, 0, 0], sizes = [8, 16, 16], strides = [1, 1, 1]} : vector<8x16x20xf32> to vector<8x16x16xf32>
    %57 = vector.shape_cast %56 : vector<8x16x16xf32> to vector<8x256xf32>
    %c0_48 = arith.constant 0 : index
    %c0_49 = arith.constant 0 : index
    %c0_50 = arith.constant 0 : index
    %58 = vector.load %arg3[%c0_48, %c0_49, %c0_50] : memref<1x8x256xf32, #tpu.memory_space<vmem>>, vector<1x8x256xf32>
    %59 = vector.shape_cast %58 : vector<1x8x256xf32> to vector<8x256xf32>
    %60 = vector.shape_cast %57 : vector<8x256xf32> to vector<1x8x256xf32>
    tpu.vector_store %arg3[%c0_48, %c0_49, %c0_50], %60 {strides = array<i32>} : memref<1x8x256xf32, #tpu.memory_space<vmem>>, vector<1x8x256xf32>,
    return
  }
  func.func @transform_0(%arg0: i32) -> (i32, i32, i32) {
    %c0_i32 = arith.constant 0 : i32
    %c0_i32_0 = arith.constant 0 : i32
    %c0_i32_1 = arith.constant 0 : i32
    return %arg0, %c0_i32, %c0_i32_0 : i32, i32, i32
  }
  func.func @transform_1(%arg0: i32) -> (i32, i32, i32) {
    %c0_i32 = arith.constant 0 : i32
    %c0_i32_0 = arith.constant 0 : i32
    %c0_i32_1 = arith.constant 0 : i32
    %c0_i32_2 = arith.constant 0 : i32
    return %c0_i32, %c0_i32_0, %c0_i32_1 : i32, i32, i32
  }
  func.func @transform_2(%arg0: i32) -> (i32, i32, i32) {
    %c0_i32 = arith.constant 0 : i32
    %c0_i32_0 = arith.constant 0 : i32
    %c0_i32_1 = arith.constant 0 : i32
    return %arg0, %c0_i32, %c0_i32_0 : i32, i32, i32
  }
}

</mosaic_0001>

<llo_original>
// kernel: tpu_custom_call.1
$region0: #{tpu_custom_call.1}
  #allocation0 [shape = 'u32[]', space=smem, size = 0x4, offset = 0x4, fixed_abs, tag = 'smem constant byte address 0x4 - core index']
  #allocation1 [shape = 'u32[144,128]{1,0:T(1,128)}', space=vmem, size = 0x12000, scoped, tag = 'internal scratch']
  %s0 = inlined_call_operand.vmem [shape: f32[2,4,420], index: 0, kind: input, shape index: {}]
  %s1 = inlined_call_operand.vmem [shape: f32[9,8,4], index: 1, kind: input, shape index: {}]
  %s2 = inlined_call_operand.hbm [shape: f32[2,8,256], index: 2, kind: output, shape index: {}]
  %s3 = sld [smem:[#allocation0]]
  $region41: #{tpu_custom_call.1} parent=0
    _
  %s5 = ssub.s32 1, %s3
  %s6 = scalar_select 0, %s5, %s3
  $region1: #{tpu_custom_call.1} parent=0
    #allocation2 [shape = 'u8[16384]{0}', space=vmem, size = 0x4000, scoped, tag = 'output window, operand 0']
    #allocation3 [shape = 's32[2]{0}', space=sflag, size = 0x8, scoped, tag = 'scoped memory for tpu_custom_call.1']
    %7 = vsyncpa [#allocation3], 0
    %s8 = scalar_lea.sflag [#allocation3], 1
    %9 = vsyncpa %s8, 0
    loop: start=0, step=1, limit=4
    $region2: #{tpu_custom_call.1} parent=1 // loop_pre_header
      _
    $region3: #{tpu_custom_call.1} parent=1 // loop_header
      %s11 = sphi 0, %s15
      %p12 = scmp.ge.s32.totalorder %s11, 4
      %s21 = sphi 0, %s23
      %s24 = sphi 0, %s21
      %s25 = sphi 0, %s24
      %s41 = sphi 0, %s25
      %s45 = sphi 0, %s45
      %s47 = sphi 0, %s45
      %s48 = sphi 0, %s47
      %s62 = sphi 0, %s48
      %s68 = sphi 0, %s70
      %s71 = sphi 0, %s68
      %s72 = sphi 0, %s71
      %s88 = sphi 0, %s72
    $region4: #{tpu_custom_call.1} parent=1 // loop_header_branch
      %14 = sbr.rel (%p12) target = $region8
    $region5: #{tpu_custom_call.1} parent=1 // loop_body
      %s16 = ssub.s32 %s11, 1
      %s17 = ssub.s32 %s11, 2
      %s18 = sadd.s32 %s11, 1
      %s19 = ssub.s32 %s11, %s18
      %p20 = scmp.eq.s32.totalorder %s19, 0
      %s22 = sadd.s32 %s21, 1
      %s23 = scalar_select %p20, %s21, %s22
      %p26 = pneg %p20
      %p27 = scmp.eq.s32.totalorder %s11, 1
      %p28 = por %p26, %p27
      %p29 = scmp.ne.s32.totalorder %s21, %s24
      %p30 = scmp.eq.s32.totalorder %s11, 0
      %p31 = por %p29, %p30
      %p32 = scmp.ne.s32.totalorder %s21, %s24
      %p33 = scmp.eq.s32.totalorder %s16, 1
      %p34 = por %p32, %p33
      %p35 = scmp.ne.s32.totalorder %s24, %s25
      %p36 = scmp.eq.s32.totalorder %s16, 0
      %p37 = por %p35, %p36
      %p38 = scmp.ne.s32.totalorder %s24, %s25
      %p39 = scmp.eq.s32.totalorder %s17, 1
      %p40 = por %p38, %p39
      %p42 = scmp.ne.s32.totalorder %s25, %s41
      %p43 = scmp.eq.s32.totalorder %s17, 0
      %p44 = por %p42, %p43
      %s46 = sadd.s32 %s45, 1
      %p49 = scmp.eq.s32.totalorder %s11, 1
      %p50 = scmp.ne.s32.totalorder %s45, %s47
      %p51 = scmp.eq.s32.totalorder %s11, 0
      %p52 = por %p50, %p51
      %p53 = scmp.ne.s32.totalorder %s45, %s47
      %p54 = scmp.eq.s32.totalorder %s16, 1
      %p55 = por %p53, %p54
      %p56 = scmp.ne.s32.totalorder %s47, %s48
      %p57 = scmp.eq.s32.totalorder %s16, 0
      %p58 = por %p56, %p57
      %p59 = scmp.ne.s32.totalorder %s47, %s48
      %p60 = scmp.eq.s32.totalorder %s17, 1
      %p61 = por %p59, %p60
      %p63 = scmp.ne.s32.totalorder %s48, %s62
      %p64 = scmp.eq.s32.totalorder %s17, 0
      %p65 = por %p63, %p64
      %s66 = ssub.s32 %s11, %s18
      %p67 = scmp.eq.s32.totalorder %s66, 0
      %s69 = sadd.s32 %s68, 1
      %s70 = scalar_select %p67, %s68, %s69
      %p73 = pneg %p67
      %p74 = scmp.eq.s32.totalorder %s11, 1
      %p75 = por %p73, %p74
      %p76 = scmp.ne.s32.totalorder %s68, %s71
      %p77 = scmp.eq.s32.totalorder %s11, 0
      %p78 = por %p76, %p77
      %p79 = scmp.ne.s32.totalorder %s68, %s71
      %p80 = scmp.eq.s32.totalorder %s16, 1
      %p81 = por %p79, %p80
      %p82 = scmp.ne.s32.totalorder %s71, %s72
      %p83 = scmp.eq.s32.totalorder %s16, 0
      %p84 = por %p82, %p83
      %p85 = scmp.ne.s32.totalorder %s71, %s72
      %p86 = scmp.eq.s32.totalorder %s17, 1
      %p87 = por %p85, %p86
      %p89 = scmp.ne.s32.totalorder %s72, %s88
      %p90 = scmp.eq.s32.totalorder %s17, 0
      %p91 = por %p89, %p90
      %p92 = scmp.le.s32.totalorder 1, %s11
      %p93 = scmp.lt.s32.totalorder %s11, 3
      %p94 = pnand %p92, %p93
      %p95 = pneg %p94
      // Predicated region
      $region9: #{tpu_custom_call.1} parent=5 // pred_check
        _
      $region10: #{tpu_custom_call.1} parent=5 // pred_check_branch
        %97 = sbr.rel (%p94) target = $region12
      $region11: #{tpu_custom_call.1} parent=5 // pred_region
        %s98 = ssub.s32 %s11, 1
        // Predicated region
        $region13: #{tpu_custom_call.1} parent=11 // pred_check
          %p99 = pneg %p58
        $region14: #{tpu_custom_call.1} parent=11 // pred_check_branch
          %101 = sbr.rel (%p99) target = $region16
        $region15: #{tpu_custom_call.1} parent=11 // pred_region
          _
        $region16: #{tpu_custom_call.1} parent=11 // pred_fallthru
          _
      $region12: #{tpu_custom_call.1} parent=5 // pred_fallthru
        _
      %p102 = scmp.lt.s32.totalorder %s11, 2
      // Predicated region
      $region17: #{tpu_custom_call.1} parent=5 // pred_check
        %p103 = pneg %p102
      $region18: #{tpu_custom_call.1} parent=5 // pred_check_branch
        %105 = sbr.rel (%p103) target = $region20
      $region19: #{tpu_custom_call.1} parent=5 // pred_region
        // Predicated region
        $region21: #{tpu_custom_call.1} parent=19 // pred_check
          %p106 = pneg %p31
        $region22: #{tpu_custom_call.1} parent=19 // pred_check_branch
          %108 = sbr.rel (%p106) target = $region24
        $region23: #{tpu_custom_call.1} parent=19 // pred_region
          %p109 = scmp.lt.s32.totalorder %s11, 1
          %s110 = scalar_select %p109, %s11, 1
          %s111 = smul.addr %s110, 4
          %s112 = smul.addr %s111, 4
          %s113 = scalar_lea.vmem %s0, %s112
        $region24: #{tpu_custom_call.1} parent=19 // pred_fallthru
          _
      $region20: #{tpu_custom_call.1} parent=5 // pred_fallthru
        _
      %p114 = scmp.le.s32.totalorder 1, %s11
      %p115 = scmp.lt.s32.totalorder %s11, 3
      %p116 = pnand %p114, %p115
      %p117 = pneg %p116
      // Predicated region
      $region25: #{tpu_custom_call.1} parent=5 // pred_check
        _
      $region26: #{tpu_custom_call.1} parent=5 // pred_check_branch
        %119 = sbr.rel (%p116) target = $region28
      $region27: #{tpu_custom_call.1} parent=5 // pred_region
        %s120 = ssub.s32 %s11, 1
        %p121 = scmp.lt.s32.totalorder %s16, 1
        %s122 = scalar_select %p121, %s16, 1
        %s123 = smul.addr %s122, 4
        %s124 = smul.addr %s123, 4
        %s125 = scalar_lea.vmem %s0, %s124
        %p126 = pneg %p37
        %p127 = pneg %p34
        %p128 = pneg %p58
        %p129 = pneg %p55
        %p130 = pneg %p84
        %p131 = pneg %p81
        %s132 = sand.u32 %s71, 1
        %s133 = scalar_lea.sflag [#allocation3], %s132
        %s134 = sand.u32 %s71, 1
        %s135 = smul.addr %s134, 16
        %s136 = scalar_lea.vmem [#allocation2], %s135
        %p137 = scmp.lt.s32.totalorder %s16, 1
        %s138 = scalar_select %p137, %s16, 1
        %s139 = smul.addr %s138, 4
        %s140 = smul.addr %s139, 4
        %s141 = scalar_lea.vmem %s0, %s140
        %v142 = vld [vmem:[%s141] sm:$0xff]
        %v143 = vld [vmem:[%s141 + $0x8] sm:$0xf]
        %v144 = vld [vmem:[%s1] sm:$0xff]
        %s145 = scalar_lea.vmem %s1, 8
        %v146 = vld [vmem:[%s145] sm:$0xff]
        %v149 = vcombine.high %v142, %v142
        %150 = vrot.lane.b32.xlu0 %v142, 126
        %v151 = vpop.permute.xlu0 %150
        %152 = vrot.lane.b32.xlu0 %v149, 126
        %v153 = vpop.permute.xlu0 %152
        %154 = vrot.lane.b32.xlu0 %v143, 126
        %v155 = vpop.permute.xlu0 %154
        %vm156 = vcmask 1031168
        %v157 = vsel %vm156, %v151, %v153
        %v158 = vsel %vm156, %v153, %v155
        %vm159 = vcmask 31744
        %v161 = vsel %vm159, %v146, 0
        %vm163 = vcmask 1043456
        %v164 = vsel %vm163, %v157, 0
        %v166 = vsel %vm163, %v158, 0
        %v168 = vsel %vm163, %v155, 0
        %170 = vmatprep.subr.mxu0 0.0
        %171 = vmatpush1.msra.mxu0 0.0
        %172 = vmatprep.subr.mxu0 0.0
        %173 = vmatpush1.msra.mxu0 0.0
        %174 = vmatprep.subr.mxu0 0.0
        %175 = vmatpush1.msra.mxu0 0.0
        %176 = vmatprep.subr.mxu0 0.0
        %177 = vmatpush1.msra.mxu0 0.0
        %178 = vmatprep.subr.mxu0 0.0
        %179 = vmatpush1.msra.mxu0 0.0
        %180 = vmatprep.subr.mxu0 0.0
        %181 = vmatpush1.msra.mxu0 0.0
        %182 = vmatprep.subr.mxu0 0.0
        %183 = vmatpush1.msra.mxu0 0.0
        %184 = vmatprep.subr.mxu0 0.0
        %185 = vmatpush1.msra.mxu0 0.0
        %186 = vmatprep.subr.mxu0 0.0
        %187 = vmatpush1.msra.mxu0 0.0
        %188 = vmatprep.subr.mxu0 0.0
        %189 = vmatpush1.msra.mxu0 0.0
        %190 = vmatprep.subr.mxu0 0.0
        %191 = vmatpush1.msra.mxu0 0.0
        %192 = vmatprep.subr.mxu0 0.0
        %193 = vmatpush1.msra.mxu0 0.0
        %194 = vmatprep.subr.mxu0 0.0
        %195 = vmatpush1.msra.mxu0 0.0
        %196 = vmatprep.subr.mxu0 0.0
        %197 = vmatpush1.msra.mxu0 0.0
        %198 = vmatprep.subr.mxu0 0.0
        %199 = vmatpush1.msra.mxu0 0.0
        %200 = vmatprep.subr.mxu0 %v166
        %201 = vmatpush1.msra.mxu0 %v164
        %202 = vmatprep.subr.mxu0 0.0
        %203 = vmatpush2.msra.mxu0 0.0
        %204 = vmatprep.subr.mxu0 0.0
        %205 = vmatpush2.msra.mxu0 0.0
        %206 = vmatprep.subr.mxu0 0.0
        %207 = vmatpush2.msra.mxu0 0.0
        %208 = vmatprep.subr.mxu0 0.0
        %209 = vmatpush2.msra.mxu0 0.0
        %210 = vmatprep.subr.mxu0 0.0
        %211 = vmatpush2.msra.mxu0 0.0
        %212 = vmatprep.subr.mxu0 0.0
        %213 = vmatpush2.msra.mxu0 0.0
        %214 = vmatprep.subr.mxu0 0.0
        %215 = vmatpush2.msra.mxu0 0.0
        %216 = vmatprep.subr.mxu0 0.0
        %217 = vmatpush2.msra.mxu0 0.0
        %218 = vmatprep.subr.mxu0 0.0
        %219 = vmatpush2.msra.mxu0 0.0
        %220 = vmatprep.subr.mxu0 0.0
        %221 = vmatpush2.msra.mxu0 0.0
        %222 = vmatprep.subr.mxu0 0.0
        %223 = vmatpush2.msra.mxu0 0.0
        %224 = vmatprep.subr.mxu0 0.0
        %225 = vmatpush2.msra.mxu0 0.0
        %226 = vmatprep.subr.mxu0 0.0
        %227 = vmatpush2.msra.mxu0 0.0
        %228 = vmatprep.subr.mxu0 0.0
        %229 = vmatpush2.msra.mxu0 0.0
        %230 = vmatprep.subr.mxu0 0.0
        %231 = vmatpush2.msra.mxu0 0.0
        %232 = vmatprep.subr.mxu0 0.0
        %233 = vmatpush2.msra.mxu0 0.0
        %234 = vmatprep.mubr.f32.mxu0 0.0
        %235 = vmatmul.mubr.f32.gmra.mxu0 %v161
        %v236 = vpop.f32.mrf.mxu0
        %v237 = vadd.f32 0.0, %v236
        %v238 = vpop.f32.mrf.mxu0
        %v239 = vadd.f32 0.0, %v238
        %240 = vdwg.mxu0
        %241 = vmatprep.subr.mxu0 0.0
        %242 = vmatpush1.msra.mxu0 0.0
        %243 = vmatprep.subr.mxu0 0.0
        %244 = vmatpush1.msra.mxu0 0.0
        %245 = vmatprep.subr.mxu0 0.0
        %246 = vmatpush1.msra.mxu0 0.0
        %247 = vmatprep.subr.mxu0 0.0
        %248 = vmatpush1.msra.mxu0 0.0
        %249 = vmatprep.subr.mxu0 0.0
        %250 = vmatpush1.msra.mxu0 0.0
        %251 = vmatprep.subr.mxu0 0.0
        %252 = vmatpush1.msra.mxu0 0.0
        %253 = vmatprep.subr.mxu0 0.0
        %254 = vmatpush1.msra.mxu0 0.0
        %255 = vmatprep.subr.mxu0 0.0
        %256 = vmatpush1.msra.mxu0 0.0
        %257 = vmatprep.subr.mxu0 0.0
        %258 = vmatpush1.msra.mxu0 0.0
        %259 = vmatprep.subr.mxu0 0.0
        %260 = vmatpush1.msra.mxu0 0.0
        %261 = vmatprep.subr.mxu0 0.0
        %262 = vmatpush1.msra.mxu0 0.0
        %263 = vmatprep.subr.mxu0 0.0
        %264 = vmatpush1.msra.mxu0 0.0
        %265 = vmatprep.subr.mxu0 0.0
        %266 = vmatpush1.msra.mxu0 0.0
        %267 = vmatprep.subr.mxu0 0.0
        %268 = vmatpush1.msra.mxu0 0.0
        %269 = vmatprep.subr.mxu0 0.0
        %270 = vmatpush1.msra.mxu0 0.0
        %271 = vmatprep.subr.mxu0 0.0
        %272 = vmatpush1.msra.mxu0 %v168
        %273 = vmatprep.subr.mxu0 0.0
        %274 = vmatpush2.msra.mxu0 0.0
        %275 = vmatprep.subr.mxu0 0.0
        %276 = vmatpush2.msra.mxu0 0.0
        %277 = vmatprep.subr.mxu0 0.0
        %278 = vmatpush2.msra.mxu0 0.0
        %279 = vmatprep.subr.mxu0 0.0
        %280 = vmatpush2.msra.mxu0 0.0
        %281 = vmatprep.subr.mxu0 0.0
        %282 = vmatpush2.msra.mxu0 0.0
        %283 = vmatprep.subr.mxu0 0.0
        %284 = vmatpush2.msra.mxu0 0.0
        %285 = vmatprep.subr.mxu0 0.0
        %286 = vmatpush2.msra.mxu0 0.0
        %287 = vmatprep.subr.mxu0 0.0
        %288 = vmatpush2.msra.mxu0 0.0
        %289 = vmatprep.subr.mxu0 0.0
        %290 = vmatpush2.msra.mxu0 0.0
        %291 = vmatprep.subr.mxu0 0.0
        %292 = vmatpush2.msra.mxu0 0.0
        %293 = vmatprep.subr.mxu0 0.0
        %294 = vmatpush2.msra.mxu0 0.0
        %295 = vmatprep.subr.mxu0 0.0
        %296 = vmatpush2.msra.mxu0 0.0
        %297 = vmatprep.subr.mxu0 0.0
        %298 = vmatpush2.msra.mxu0 0.0
        %299 = vmatprep.subr.mxu0 0.0
        %300 = vmatpush2.msra.mxu0 0.0
        %301 = vmatprep.subr.mxu0 0.0
        %302 = vmatpush2.msra.mxu0 0.0
        %303 = vmatprep.subr.mxu0 0.0
        %304 = vmatpush2.msra.mxu0 0.0
        %305 = vmatprep.mubr.f32.mxu0 0.0
        %306 = vmatmul.mubr.f32.gmra.mxu0 %v161
        %v307 = vpop.f32.mrf.mxu0
        %v308 = vadd.f32 0.0, %v307
        %v309 = vpop.f32.mrf.mxu0
        %310 = vdwg.mxu0
        %v312 = vsel %vm159, %v144, 0
        %v314 = vsel %vm163, %v142, 0
        %v316 = vsel %vm163, %v149, 0
        %v318 = vsel %vm163, %v143, 0
        %320 = vmatprep.subr.mxu0 0.0
        %321 = vmatpush1.msra.mxu0 0.0
        %322 = vmatprep.subr.mxu0 0.0
        %323 = vmatpush1.msra.mxu0 0.0
        %324 = vmatprep.subr.mxu0 0.0
        %325 = vmatpush1.msra.mxu0 0.0
        %326 = vmatprep.subr.mxu0 0.0
        %327 = vmatpush1.msra.mxu0 0.0
        %328 = vmatprep.subr.mxu0 0.0
        %329 = vmatpush1.msra.mxu0 0.0
        %330 = vmatprep.subr.mxu0 0.0
        %331 = vmatpush1.msra.mxu0 0.0
        %332 = vmatprep.subr.mxu0 0.0
        %333 = vmatpush1.msra.mxu0 0.0
        %334 = vmatprep.subr.mxu0 0.0
        %335 = vmatpush1.msra.mxu0 0.0
        %336 = vmatprep.subr.mxu0 0.0
        %337 = vmatpush1.msra.mxu0 0.0
        %338 = vmatprep.subr.mxu0 0.0
        %339 = vmatpush1.msra.mxu0 0.0
        %340 = vmatprep.subr.mxu0 0.0
        %341 = vmatpush1.msra.mxu0 0.0
        %342 = vmatprep.subr.mxu0 0.0
        %343 = vmatpush1.msra.mxu0 0.0
        %344 = vmatprep.subr.mxu0 0.0
        %345 = vmatpush1.msra.mxu0 0.0
        %346 = vmatprep.subr.mxu0 0.0
        %347 = vmatpush1.msra.mxu0 0.0
        %348 = vmatprep.subr.mxu0 0.0
        %349 = vmatpush1.msra.mxu0 0.0
        %350 = vmatprep.subr.mxu0 %v316
        %351 = vmatpush1.msra.mxu0 %v314
        %352 = vmatprep.subr.mxu0 0.0
        %353 = vmatpush2.msra.mxu0 0.0
        %354 = vmatprep.subr.mxu0 0.0
        %355 = vmatpush2.msra.mxu0 0.0
        %356 = vmatprep.subr.mxu0 0.0
        %357 = vmatpush2.msra.mxu0 0.0
        %358 = vmatprep.subr.mxu0 0.0
        %359 = vmatpush2.msra.mxu0 0.0
        %360 = vmatprep.subr.mxu0 0.0
        %361 = vmatpush2.msra.mxu0 0.0
        %362 = vmatprep.subr.mxu0 0.0
        %363 = vmatpush2.msra.mxu0 0.0
        %364 = vmatprep.subr.mxu0 0.0
        %365 = vmatpush2.msra.mxu0 0.0
        %366 = vmatprep.subr.mxu0 0.0
        %367 = vmatpush2.msra.mxu0 0.0
        %368 = vmatprep.subr.mxu0 0.0
        %369 = vmatpush2.msra.mxu0 0.0
        %370 = vmatprep.subr.mxu0 0.0
        %371 = vmatpush2.msra.mxu0 0.0
        %372 = vmatprep.subr.mxu0 0.0
        %373 = vmatpush2.msra.mxu0 0.0
        %374 = vmatprep.subr.mxu0 0.0
        %375 = vmatpush2.msra.mxu0 0.0
        %376 = vmatprep.subr.mxu0 0.0
        %377 = vmatpush2.msra.mxu0 0.0
        %378 = vmatprep.subr.mxu0 0.0
        %379 = vmatpush2.msra.mxu0 0.0
        %380 = vmatprep.subr.mxu0 0.0
        %381 = vmatpush2.msra.mxu0 0.0
        %382 = vmatprep.subr.mxu0 0.0
        %383 = vmatpush2.msra.mxu0 0.0
        %384 = vmatprep.mubr.f32.mxu0 0.0
        %385 = vmatmul.mubr.f32.gmra.mxu0 %v312
        %v386 = vpop.f32.mrf.mxu0
        %v387 = vadd.f32 %v237, %v386
        %v388 = vpop.f32.mrf.mxu0
        %v389 = vadd.f32 %v239, %v388
        %390 = vdwg.mxu0
        %391 = vmatprep.subr.mxu0 0.0
        %392 = vmatpush1.msra.mxu0 0.0
        %393 = vmatprep.subr.mxu0 0.0
        %394 = vmatpush1.msra.mxu0 0.0
        %395 = vmatprep.subr.mxu0 0.0
        %396 = vmatpush1.msra.mxu0 0.0
        %397 = vmatprep.subr.mxu0 0.0
        %398 = vmatpush1.msra.mxu0 0.0
        %399 = vmatprep.subr.mxu0 0.0
        %400 = vmatpush1.msra.mxu0 0.0
        %401 = vmatprep.subr.mxu0 0.0
        %402 = vmatpush1.msra.mxu0 0.0
        %403 = vmatprep.subr.mxu0 0.0
        %404 = vmatpush1.msra.mxu0 0.0
        %405 = vmatprep.subr.mxu0 0.0
        %406 = vmatpush1.msra.mxu0 0.0
        %407 = vmatprep.subr.mxu0 0.0
        %408 = vmatpush1.msra.mxu0 0.0
        %409 = vmatprep.subr.mxu0 0.0
        %410 = vmatpush1.msra.mxu0 0.0
        %411 = vmatprep.subr.mxu0 0.0
        %412 = vmatpush1.msra.mxu0 0.0
        %413 = vmatprep.subr.mxu0 0.0
        %414 = vmatpush1.msra.mxu0 0.0
        %415 = vmatprep.subr.mxu0 0.0
        %416 = vmatpush1.msra.mxu0 0.0
        %417 = vmatprep.subr.mxu0 0.0
        %418 = vmatpush1.msra.mxu0 0.0
        %419 = vmatprep.subr.mxu0 0.0
        %420 = vmatpush1.msra.mxu0 0.0
        %421 = vmatprep.subr.mxu0 0.0
        %422 = vmatpush1.msra.mxu0 %v318
        %423 = vmatprep.subr.mxu0 0.0
        %424 = vmatpush2.msra.mxu0 0.0
        %425 = vmatprep.subr.mxu0 0.0
        %426 = vmatpush2.msra.mxu0 0.0
        %427 = vmatprep.subr.mxu0 0.0
        %428 = vmatpush2.msra.mxu0 0.0
        %429 = vmatprep.subr.mxu0 0.0
        %430 = vmatpush2.msra.mxu0 0.0
        %431 = vmatprep.subr.mxu0 0.0
        %432 = vmatpush2.msra.mxu0 0.0
        %433 = vmatprep.subr.mxu0 0.0
        %434 = vmatpush2.msra.mxu0 0.0
        %435 = vmatprep.subr.mxu0 0.0
        %436 = vmatpush2.msra.mxu0 0.0
        %437 = vmatprep.subr.mxu0 0.0
        %438 = vmatpush2.msra.mxu0 0.0
        %439 = vmatprep.subr.mxu0 0.0
        %440 = vmatpush2.msra.mxu0 0.0
        %441 = vmatprep.subr.mxu0 0.0
        %442 = vmatpush2.msra.mxu0 0.0
        %443 = vmatprep.subr.mxu0 0.0
        %444 = vmatpush2.msra.mxu0 0.0
        %445 = vmatprep.subr.mxu0 0.0
        %446 = vmatpush2.msra.mxu0 0.0
        %447 = vmatprep.subr.mxu0 0.0
        %448 = vmatpush2.msra.mxu0 0.0
        %449 = vmatprep.subr.mxu0 0.0
        %450 = vmatpush2.msra.mxu0 0.0
        %451 = vmatprep.subr.mxu0 0.0
        %452 = vmatpush2.msra.mxu0 0.0
        %453 = vmatprep.subr.mxu0 0.0
        %454 = vmatpush2.msra.mxu0 0.0
        %455 = vmatprep.mubr.f32.mxu0 0.0
        %456 = vmatmul.mubr.f32.gmra.mxu0 %v312
        %v457 = vpop.f32.mrf.mxu0
        %v458 = vadd.f32 %v308, %v457
        %v459 = vpop.f32.mrf.mxu0
        %460 = vdwg.mxu0
        %v461 = vld [vmem:[%s141] sm:$0xff]
        %v462 = vld [vmem:[%s141 + $0x8] sm:$0xf]
        %s463 = scalar_lea.vmem %s1, 16
        %v464 = vld [vmem:[%s463] sm:$0xff]
        %v467 = vcombine.high %v461, %v461
        %468 = vrot.lane.b32.xlu0 %v461, 124
        %v469 = vpop.permute.xlu0 %468
        %470 = vrot.lane.b32.xlu0 %v467, 124
        %v471 = vpop.permute.xlu0 %470
        %472 = vrot.lane.b32.xlu0 %v462, 124
        %v473 = vpop.permute.xlu0 %472
        %vm474 = vcmask 1014784
        %v475 = vsel %vm474, %v469, %v471
        %v476 = vsel %vm474, %v471, %v473
        %v478 = vsel %vm159, %v464, 0
        %v480 = vsel %vm163, %v475, 0
        %v482 = vsel %vm163, %v476, 0
        %v484 = vsel %vm163, %v473, 0
        %486 = vmatprep.subr.mxu0 0.0
        %487 = vmatpush1.msra.mxu0 0.0
        %488 = vmatprep.subr.mxu0 0.0
        %489 = vmatpush1.msra.mxu0 0.0
        %490 = vmatprep.subr.mxu0 0.0
        %491 = vmatpush1.msra.mxu0 0.0
        %492 = vmatprep.subr.mxu0 0.0
        %493 = vmatpush1.msra.mxu0 0.0
        %494 = vmatprep.subr.mxu0 0.0
        %495 = vmatpush1.msra.mxu0 0.0
        %496 = vmatprep.subr.mxu0 0.0
        %497 = vmatpush1.msra.mxu0 0.0
        %498 = vmatprep.subr.mxu0 0.0
        %499 = vmatpush1.msra.mxu0 0.0
        %500 = vmatprep.subr.mxu0 0.0
        %501 = vmatpush1.msra.mxu0 0.0
        %502 = vmatprep.subr.mxu0 0.0
        %503 = vmatpush1.msra.mxu0 0.0
        %504 = vmatprep.subr.mxu0 0.0
        %505 = vmatpush1.msra.mxu0 0.0
        %506 = vmatprep.subr.mxu0 0.0
        %507 = vmatpush1.msra.mxu0 0.0
        %508 = vmatprep.subr.mxu0 0.0
        %509 = vmatpush1.msra.mxu0 0.0
        %510 = vmatprep.subr.mxu0 0.0
        %511 = vmatpush1.msra.mxu0 0.0
        %512 = vmatprep.subr.mxu0 0.0
        %513 = vmatpush1.msra.mxu0 0.0
        %514 = vmatprep.subr.mxu0 0.0
        %515 = vmatpush1.msra.mxu0 0.0
        %516 = vmatprep.subr.mxu0 %v482
        %517 = vmatpush1.msra.mxu0 %v480
        %518 = vmatprep.subr.mxu0 0.0
        %519 = vmatpush2.msra.mxu0 0.0
        %520 = vmatprep.subr.mxu0 0.0
        %521 = vmatpush2.msra.mxu0 0.0
        %522 = vmatprep.subr.mxu0 0.0
        %523 = vmatpush2.msra.mxu0 0.0
        %524 = vmatprep.subr.mxu0 0.0
        %525 = vmatpush2.msra.mxu0 0.0
        %526 = vmatprep.subr.mxu0 0.0
        %527 = vmatpush2.msra.mxu0 0.0
        %528 = vmatprep.subr.mxu0 0.0
        %529 = vmatpush2.msra.mxu0 0.0
        %530 = vmatprep.subr.mxu0 0.0
        %531 = vmatpush2.msra.mxu0 0.0
        %532 = vmatprep.subr.mxu0 0.0
        %533 = vmatpush2.msra.mxu0 0.0
        %534 = vmatprep.subr.mxu0 0.0
        %535 = vmatpush2.msra.mxu0 0.0
        %536 = vmatprep.subr.mxu0 0.0
        %537 = vmatpush2.msra.mxu0 0.0
        %538 = vmatprep.subr.mxu0 0.0
        %539 = vmatpush2.msra.mxu0 0.0
        %540 = vmatprep.subr.mxu0 0.0
        %541 = vmatpush2.msra.mxu0 0.0
        %542 = vmatprep.subr.mxu0 0.0
        %543 = vmatpush2.msra.mxu0 0.0
        %544 = vmatprep.subr.mxu0 0.0
        %545 = vmatpush2.msra.mxu0 0.0
        %546 = vmatprep.subr.mxu0 0.0
        %547 = vmatpush2.msra.mxu0 0.0
        %548 = vmatprep.subr.mxu0 0.0
        %549 = vmatpush2.msra.mxu0 0.0
        %550 = vmatprep.mubr.f32.mxu0 0.0
        %551 = vmatmul.mubr.f32.gmra.mxu0 %v478
        %v552 = vpop.f32.mrf.mxu0
        %v553 = vadd.f32 0.0, %v552
        %v554 = vpop.f32.mrf.mxu0
        %v555 = vadd.f32 0.0, %v554
        %556 = vdwg.mxu0
        %557 = vmatprep.subr.mxu0 0.0
        %558 = vmatpush1.msra.mxu0 0.0
        %559 = vmatprep.subr.mxu0 0.0
        %560 = vmatpush1.msra.mxu0 0.0
        %561 = vmatprep.subr.mxu0 0.0
        %562 = vmatpush1.msra.mxu0 0.0
        %563 = vmatprep.subr.mxu0 0.0
        %564 = vmatpush1.msra.mxu0 0.0
        %565 = vmatprep.subr.mxu0 0.0
        %566 = vmatpush1.msra.mxu0 0.0
        %567 = vmatprep.subr.mxu0 0.0
        %568 = vmatpush1.msra.mxu0 0.0
        %569 = vmatprep.subr.mxu0 0.0
        %570 = vmatpush1.msra.mxu0 0.0
        %571 = vmatprep.subr.mxu0 0.0
        %572 = vmatpush1.msra.mxu0 0.0
        %573 = vmatprep.subr.mxu0 0.0
        %574 = vmatpush1.msra.mxu0 0.0
        %575 = vmatprep.subr.mxu0 0.0
        %576 = vmatpush1.msra.mxu0 0.0
        %577 = vmatprep.subr.mxu0 0.0
        %578 = vmatpush1.msra.mxu0 0.0
        %579 = vmatprep.subr.mxu0 0.0
        %580 = vmatpush1.msra.mxu0 0.0
        %581 = vmatprep.subr.mxu0 0.0
        %582 = vmatpush1.msra.mxu0 0.0
        %583 = vmatprep.subr.mxu0 0.0
        %584 = vmatpush1.msra.mxu0 0.0
        %585 = vmatprep.subr.mxu0 0.0
        %586 = vmatpush1.msra.mxu0 0.0
        %587 = vmatprep.subr.mxu0 0.0
        %588 = vmatpush1.msra.mxu0 %v484
        %589 = vmatprep.subr.mxu0 0.0
        %590 = vmatpush2.msra.mxu0 0.0
        %591 = vmatprep.subr.mxu0 0.0
        %592 = vmatpush2.msra.mxu0 0.0
        %593 = vmatprep.subr.mxu0 0.0
        %594 = vmatpush2.msra.mxu0 0.0
        %595 = vmatprep.subr.mxu0 0.0
        %596 = vmatpush2.msra.mxu0 0.0
        %597 = vmatprep.subr.mxu0 0.0
        %598 = vmatpush2.msra.mxu0 0.0
        %599 = vmatprep.subr.mxu0 0.0
        %600 = vmatpush2.msra.mxu0 0.0
        %601 = vmatprep.subr.mxu0 0.0
        %602 = vmatpush2.msra.mxu0 0.0
        %603 = vmatprep.subr.mxu0 0.0
        %604 = vmatpush2.msra.mxu0 0.0
        %605 = vmatprep.subr.mxu0 0.0
        %606 = vmatpush2.msra.mxu0 0.0
        %607 = vmatprep.subr.mxu0 0.0
        %608 = vmatpush2.msra.mxu0 0.0
        %609 = vmatprep.subr.mxu0 0.0
        %610 = vmatpush2.msra.mxu0 0.0
        %611 = vmatprep.subr.mxu0 0.0
        %612 = vmatpush2.msra.mxu0 0.0
        %613 = vmatprep.subr.mxu0 0.0
        %614 = vmatpush2.msra.mxu0 0.0
        %615 = vmatprep.subr.mxu0 0.0
        %616 = vmatpush2.msra.mxu0 0.0
        %617 = vmatprep.subr.mxu0 0.0
        %618 = vmatpush2.msra.mxu0 0.0
        %619 = vmatprep.subr.mxu0 0.0
        %620 = vmatpush2.msra.mxu0 0.0
        %621 = vmatprep.mubr.f32.mxu0 0.0
        %622 = vmatmul.mubr.f32.gmra.mxu0 %v478
        %v623 = vpop.f32.mrf.mxu0
        %v624 = vadd.f32 0.0, %v623
        %v625 = vpop.f32.mrf.mxu0
        %626 = vdwg.mxu0
        %v627 = vadd.f32 %v387, %v553
        %v628 = vadd.f32 %v389, %v555
        %v629 = vadd.f32 %v458, %v624
        %v630 = vld [vmem:[%s141] sm:$0xff]
        %v631 = vld [vmem:[%s141 + $0x8] sm:$0xf]
        %s632 = scalar_lea.vmem %s1, 24
        %v633 = vld [vmem:[%s632] sm:$0xff]
        %v636 = vcombine.high %v630, %v630
        %637 = vrot.lane.b32.xlu0 %v630, 88
        %v638 = vpop.permute.xlu0 %637
        %639 = vrot.lane.b32.xlu0 %v636, 88
        %v640 = vpop.permute.xlu0 %639
        %641 = vrot.lane.b32.xlu0 %v631, 88
        %v642 = vpop.permute.xlu0 %641
        %vm643 = vcmask 719872
        %v644 = vsel %vm643, %v638, %v640
        %v645 = vsel %vm643, %v640, %v642
        %v647 = vsel %vm159, %v633, 0
        %v649 = vsel %vm163, %v644, 0
        %v651 = vsel %vm163, %v645, 0
        %v653 = vsel %vm163, %v642, 0
        %655 = vmatprep.subr.mxu0 0.0
        %656 = vmatpush1.msra.mxu0 0.0
        %657 = vmatprep.subr.mxu0 0.0
        %658 = vmatpush1.msra.mxu0 0.0
        %659 = vmatprep.subr.mxu0 0.0
        %660 = vmatpush1.msra.mxu0 0.0
        %661 = vmatprep.subr.mxu0 0.0
        %662 = vmatpush1.msra.mxu0 0.0
        %663 = vmatprep.subr.mxu0 0.0
        %664 = vmatpush1.msra.mxu0 0.0
        %665 = vmatprep.subr.mxu0 0.0
        %666 = vmatpush1.msra.mxu0 0.0
        %667 = vmatprep.subr.mxu0 0.0
        %668 = vmatpush1.msra.mxu0 0.0
        %669 = vmatprep.subr.mxu0 0.0
        %670 = vmatpush1.msra.mxu0 0.0
        %671 = vmatprep.subr.mxu0 0.0
        %672 = vmatpush1.msra.mxu0 0.0
        %673 = vmatprep.subr.mxu0 0.0
        %674 = vmatpush1.msra.mxu0 0.0
        %675 = vmatprep.subr.mxu0 0.0
        %676 = vmatpush1.msra.mxu0 0.0
        %677 = vmatprep.subr.mxu0 0.0
        %678 = vmatpush1.msra.mxu0 0.0
        %679 = vmatprep.subr.mxu0 0.0
        %680 = vmatpush1.msra.mxu0 0.0
        %681 = vmatprep.subr.mxu0 0.0
        %682 = vmatpush1.msra.mxu0 0.0
        %683 = vmatprep.subr.mxu0 0.0
        %684 = vmatpush1.msra.mxu0 0.0
        %685 = vmatprep.subr.mxu0 %v651
        %686 = vmatpush1.msra.mxu0 %v649
        %687 = vmatprep.subr.mxu0 0.0
        %688 = vmatpush2.msra.mxu0 0.0
        %689 = vmatprep.subr.mxu0 0.0
        %690 = vmatpush2.msra.mxu0 0.0
        %691 = vmatprep.subr.mxu0 0.0
        %692 = vmatpush2.msra.mxu0 0.0
        %693 = vmatprep.subr.mxu0 0.0
        %694 = vmatpush2.msra.mxu0 0.0
        %695 = vmatprep.subr.mxu0 0.0
        %696 = vmatpush2.msra.mxu0 0.0
        %697 = vmatprep.subr.mxu0 0.0
        %698 = vmatpush2.msra.mxu0 0.0
        %699 = vmatprep.subr.mxu0 0.0
        %700 = vmatpush2.msra.mxu0 0.0
        %701 = vmatprep.subr.mxu0 0.0
        %702 = vmatpush2.msra.mxu0 0.0
        %703 = vmatprep.subr.mxu0 0.0
        %704 = vmatpush2.msra.mxu0 0.0
        %705 = vmatprep.subr.mxu0 0.0
        %706 = vmatpush2.msra.mxu0 0.0
        %707 = vmatprep.subr.mxu0 0.0
        %708 = vmatpush2.msra.mxu0 0.0
        %709 = vmatprep.subr.mxu0 0.0
        %710 = vmatpush2.msra.mxu0 0.0
        %711 = vmatprep.subr.mxu0 0.0
        %712 = vmatpush2.msra.mxu0 0.0
        %713 = vmatprep.subr.mxu0 0.0
        %714 = vmatpush2.msra.mxu0 0.0
        %715 = vmatprep.subr.mxu0 0.0
        %716 = vmatpush2.msra.mxu0 0.0
        %717 = vmatprep.subr.mxu0 0.0
        %718 = vmatpush2.msra.mxu0 0.0
        %719 = vmatprep.mubr.f32.mxu0 0.0
        %720 = vmatmul.mubr.f32.gmra.mxu0 %v647
        %v721 = vpop.f32.mrf.mxu0
        %v722 = vadd.f32 0.0, %v721
        %v723 = vpop.f32.mrf.mxu0
        %v724 = vadd.f32 0.0, %v723
        %725 = vdwg.mxu0
        %726 = vmatprep.subr.mxu0 0.0
        %727 = vmatpush1.msra.mxu0 0.0
        %728 = vmatprep.subr.mxu0 0.0
        %729 = vmatpush1.msra.mxu0 0.0
        %730 = vmatprep.subr.mxu0 0.0
        %731 = vmatpush1.msra.mxu0 0.0
        %732 = vmatprep.subr.mxu0 0.0
        %733 = vmatpush1.msra.mxu0 0.0
        %734 = vmatprep.subr.mxu0 0.0
        %735 = vmatpush1.msra.mxu0 0.0
        %736 = vmatprep.subr.mxu0 0.0
        %737 = vmatpush1.msra.mxu0 0.0
        %738 = vmatprep.subr.mxu0 0.0
        %739 = vmatpush1.msra.mxu0 0.0
        %740 = vmatprep.subr.mxu0 0.0
        %741 = vmatpush1.msra.mxu0 0.0
        %742 = vmatprep.subr.mxu0 0.0
        %743 = vmatpush1.msra.mxu0 0.0
        %744 = vmatprep.subr.mxu0 0.0
        %745 = vmatpush1.msra.mxu0 0.0
        %746 = vmatprep.subr.mxu0 0.0
        %747 = vmatpush1.msra.mxu0 0.0
        %748 = vmatprep.subr.mxu0 0.0
        %749 = vmatpush1.msra.mxu0 0.0
        %750 = vmatprep.subr.mxu0 0.0
        %751 = vmatpush1.msra.mxu0 0.0
        %752 = vmatprep.subr.mxu0 0.0
        %753 = vmatpush1.msra.mxu0 0.0
        %754 = vmatprep.subr.mxu0 0.0
        %755 = vmatpush1.msra.mxu0 0.0
        %756 = vmatprep.subr.mxu0 0.0
        %757 = vmatpush1.msra.mxu0 %v653
        %758 = vmatprep.subr.mxu0 0.0
        %759 = vmatpush2.msra.mxu0 0.0
        %760 = vmatprep.subr.mxu0 0.0
        %761 = vmatpush2.msra.mxu0 0.0
        %762 = vmatprep.subr.mxu0 0.0
        %763 = vmatpush2.msra.mxu0 0.0
        %764 = vmatprep.subr.mxu0 0.0
        %765 = vmatpush2.msra.mxu0 0.0
        %766 = vmatprep.subr.mxu0 0.0
        %767 = vmatpush2.msra.mxu0 0.0
        %768 = vmatprep.subr.mxu0 0.0
        %769 = vmatpush2.msra.mxu0 0.0
        %770 = vmatprep.subr.mxu0 0.0
        %771 = vmatpush2.msra.mxu0 0.0
        %772 = vmatprep.subr.mxu0 0.0
        %773 = vmatpush2.msra.mxu0 0.0
        %774 = vmatprep.subr.mxu0 0.0
        %775 = vmatpush2.msra.mxu0 0.0
        %776 = vmatprep.subr.mxu0 0.0
        %777 = vmatpush2.msra.mxu0 0.0
        %778 = vmatprep.subr.mxu0 0.0
        %779 = vmatpush2.msra.mxu0 0.0
        %780 = vmatprep.subr.mxu0 0.0
        %781 = vmatpush2.msra.mxu0 0.0
        %782 = vmatprep.subr.mxu0 0.0
        %783 = vmatpush2.msra.mxu0 0.0
        %784 = vmatprep.subr.mxu0 0.0
        %785 = vmatpush2.msra.mxu0 0.0
        %786 = vmatprep.subr.mxu0 0.0
        %787 = vmatpush2.msra.mxu0 0.0
        %788 = vmatprep.subr.mxu0 0.0
        %789 = vmatpush2.msra.mxu0 0.0
        %790 = vmatprep.mubr.f32.mxu0 0.0
        %791 = vmatmul.mubr.f32.gmra.mxu0 %v647
        %v792 = vpop.f32.mrf.mxu0
        %v793 = vadd.f32 0.0, %v792
        %v794 = vpop.f32.mrf.mxu0
        %795 = vdwg.mxu0
        %v796 = vadd.f32 %v627, %v722
        %v797 = vadd.f32 %v628, %v724
        %v798 = vadd.f32 %v629, %v793
        %v799 = vld [vmem:[%s141] sm:$0xff]
        %v800 = vld [vmem:[%s141 + $0x8] sm:$0xf]
        %s801 = scalar_lea.vmem %s1, 32
        %v802 = vld [vmem:[%s801] sm:$0xff]
        %v805 = vcombine.high %v799, %v799
        %806 = vrot.lane.b32.xlu0 %v799, 86
        %v807 = vpop.permute.xlu0 %806
        %808 = vrot.lane.b32.xlu0 %v805, 86
        %v809 = vpop.permute.xlu0 %808
        %810 = vrot.lane.b32.xlu0 %v800, 86
        %v811 = vpop.permute.xlu0 %810
        %vm812 = vcmask 703488
        %v813 = vsel %vm812, %v807, %v809
        %v814 = vsel %vm812, %v809, %v811
        %v816 = vsel %vm159, %v802, 0
        %v818 = vsel %vm163, %v813, 0
        %v820 = vsel %vm163, %v814, 0
        %v822 = vsel %vm163, %v811, 0
        %824 = vmatprep.subr.mxu0 0.0
        %825 = vmatpush1.msra.mxu0 0.0
        %826 = vmatprep.subr.mxu0 0.0
        %827 = vmatpush1.msra.mxu0 0.0
        %828 = vmatprep.subr.mxu0 0.0
        %829 = vmatpush1.msra.mxu0 0.0
        %830 = vmatprep.subr.mxu0 0.0
        %831 = vmatpush1.msra.mxu0 0.0
        %832 = vmatprep.subr.mxu0 0.0
        %833 = vmatpush1.msra.mxu0 0.0
        %834 = vmatprep.subr.mxu0 0.0
        %835 = vmatpush1.msra.mxu0 0.0
        %836 = vmatprep.subr.mxu0 0.0
        %837 = vmatpush1.msra.mxu0 0.0
        %838 = vmatprep.subr.mxu0 0.0
        %839 = vmatpush1.msra.mxu0 0.0
        %840 = vmatprep.subr.mxu0 0.0
        %841 = vmatpush1.msra.mxu0 0.0
        %842 = vmatprep.subr.mxu0 0.0
        %843 = vmatpush1.msra.mxu0 0.0
        %844 = vmatprep.subr.mxu0 0.0
        %845 = vmatpush1.msra.mxu0 0.0
        %846 = vmatprep.subr.mxu0 0.0
        %847 = vmatpush1.msra.mxu0 0.0
        %848 = vmatprep.subr.mxu0 0.0
        %849 = vmatpush1.msra.mxu0 0.0
        %850 = vmatprep.subr.mxu0 0.0
        %851 = vmatpush1.msra.mxu0 0.0
        %852 = vmatprep.subr.mxu0 0.0
        %853 = vmatpush1.msra.mxu0 0.0
        %854 = vmatprep.subr.mxu0 %v820
        %855 = vmatpush1.msra.mxu0 %v818
        %856 = vmatprep.subr.mxu0 0.0
        %857 = vmatpush2.msra.mxu0 0.0
        %858 = vmatprep.subr.mxu0 0.0
        %859 = vmatpush2.msra.mxu0 0.0
        %860 = vmatprep.subr.mxu0 0.0
        %861 = vmatpush2.msra.mxu0 0.0
        %862 = vmatprep.subr.mxu0 0.0
        %863 = vmatpush2.msra.mxu0 0.0
        %864 = vmatprep.subr.mxu0 0.0
        %865 = vmatpush2.msra.mxu0 0.0
        %866 = vmatprep.subr.mxu0 0.0
        %867 = vmatpush2.msra.mxu0 0.0
        %868 = vmatprep.subr.mxu0 0.0
        %869 = vmatpush2.msra.mxu0 0.0
        %870 = vmatprep.subr.mxu0 0.0
        %871 = vmatpush2.msra.mxu0 0.0
        %872 = vmatprep.subr.mxu0 0.0
        %873 = vmatpush2.msra.mxu0 0.0
        %874 = vmatprep.subr.mxu0 0.0
        %875 = vmatpush2.msra.mxu0 0.0
        %876 = vmatprep.subr.mxu0 0.0
        %877 = vmatpush2.msra.mxu0 0.0
        %878 = vmatprep.subr.mxu0 0.0
        %879 = vmatpush2.msra.mxu0 0.0
        %880 = vmatprep.subr.mxu0 0.0
        %881 = vmatpush2.msra.mxu0 0.0
        %882 = vmatprep.subr.mxu0 0.0
        %883 = vmatpush2.msra.mxu0 0.0
        %884 = vmatprep.subr.mxu0 0.0
        %885 = vmatpush2.msra.mxu0 0.0
        %886 = vmatprep.subr.mxu0 0.0
        %887 = vmatpush2.msra.mxu0 0.0
        %888 = vmatprep.mubr.f32.mxu0 0.0
        %889 = vmatmul.mubr.f32.gmra.mxu0 %v816
        %v890 = vpop.f32.mrf.mxu0
        %v891 = vadd.f32 0.0, %v890
        %v892 = vpop.f32.mrf.mxu0
        %v893 = vadd.f32 0.0, %v892
        %894 = vdwg.mxu0
        %895 = vmatprep.subr.mxu0 0.0
        %896 = vmatpush1.msra.mxu0 0.0
        %897 = vmatprep.subr.mxu0 0.0
        %898 = vmatpush1.msra.mxu0 0.0
        %899 = vmatprep.subr.mxu0 0.0
        %900 = vmatpush1.msra.mxu0 0.0
        %901 = vmatprep.subr.mxu0 0.0
        %902 = vmatpush1.msra.mxu0 0.0
        %903 = vmatprep.subr.mxu0 0.0
        %904 = vmatpush1.msra.mxu0 0.0
        %905 = vmatprep.subr.mxu0 0.0
        %906 = vmatpush1.msra.mxu0 0.0
        %907 = vmatprep.subr.mxu0 0.0
        %908 = vmatpush1.msra.mxu0 0.0
        %909 = vmatprep.subr.mxu0 0.0
        %910 = vmatpush1.msra.mxu0 0.0
        %911 = vmatprep.subr.mxu0 0.0
        %912 = vmatpush1.msra.mxu0 0.0
        %913 = vmatprep.subr.mxu0 0.0
        %914 = vmatpush1.msra.mxu0 0.0
        %915 = vmatprep.subr.mxu0 0.0
        %916 = vmatpush1.msra.mxu0 0.0
        %917 = vmatprep.subr.mxu0 0.0
        %918 = vmatpush1.msra.mxu0 0.0
        %919 = vmatprep.subr.mxu0 0.0
        %920 = vmatpush1.msra.mxu0 0.0
        %921 = vmatprep.subr.mxu0 0.0
        %922 = vmatpush1.msra.mxu0 0.0
        %923 = vmatprep.subr.mxu0 0.0
        %924 = vmatpush1.msra.mxu0 0.0
        %925 = vmatprep.subr.mxu0 0.0
        %926 = vmatpush1.msra.mxu0 %v822
        %927 = vmatprep.subr.mxu0 0.0
        %928 = vmatpush2.msra.mxu0 0.0
        %929 = vmatprep.subr.mxu0 0.0
        %930 = vmatpush2.msra.mxu0 0.0
        %931 = vmatprep.subr.mxu0 0.0
        %932 = vmatpush2.msra.mxu0 0.0
        %933 = vmatprep.subr.mxu0 0.0
        %934 = vmatpush2.msra.mxu0 0.0
        %935 = vmatprep.subr.mxu0 0.0
        %936 = vmatpush2.msra.mxu0 0.0
        %937 = vmatprep.subr.mxu0 0.0
        %938 = vmatpush2.msra.mxu0 0.0
        %939 = vmatprep.subr.mxu0 0.0
        %940 = vmatpush2.msra.mxu0 0.0
        %941 = vmatprep.subr.mxu0 0.0
        %942 = vmatpush2.msra.mxu0 0.0
        %943 = vmatprep.subr.mxu0 0.0
        %944 = vmatpush2.msra.mxu0 0.0
        %945 = vmatprep.subr.mxu0 0.0
        %946 = vmatpush2.msra.mxu0 0.0
        %947 = vmatprep.subr.mxu0 0.0
        %948 = vmatpush2.msra.mxu0 0.0
        %949 = vmatprep.subr.mxu0 0.0
        %950 = vmatpush2.msra.mxu0 0.0
        %951 = vmatprep.subr.mxu0 0.0
        %952 = vmatpush2.msra.mxu0 0.0
        %953 = vmatprep.subr.mxu0 0.0
        %954 = vmatpush2.msra.mxu0 0.0
        %955 = vmatprep.subr.mxu0 0.0
        %956 = vmatpush2.msra.mxu0 0.0
        %957 = vmatprep.subr.mxu0 0.0
        %958 = vmatpush2.msra.mxu0 0.0
        %959 = vmatprep.mubr.f32.mxu0 0.0
        %960 = vmatmul.mubr.f32.gmra.mxu0 %v816
        %v961 = vpop.f32.mrf.mxu0
        %v962 = vadd.f32 0.0, %v961
        %v963 = vpop.f32.mrf.mxu0
        %964 = vdwg.mxu0
        %v965 = vadd.f32 %v796, %v891
        %v966 = vadd.f32 %v797, %v893
        %v967 = vadd.f32 %v798, %v962
        %v968 = vld [vmem:[%s141] sm:$0xff]
        %v969 = vld [vmem:[%s141 + $0x8] sm:$0xf]
        %s970 = scalar_lea.vmem %s1, 40
        %v971 = vld [vmem:[%s970] sm:$0xff]
        %v974 = vcombine.high %v968, %v968
        %975 = vrot.lane.b32.xlu0 %v968, 84
        %v976 = vpop.permute.xlu0 %975
        %977 = vrot.lane.b32.xlu0 %v974, 84
        %v978 = vpop.permute.xlu0 %977
        %979 = vrot.lane.b32.xlu0 %v969, 84
        %v980 = vpop.permute.xlu0 %979
        %vm981 = vcmask 687104
        %v982 = vsel %vm981, %v976, %v978
        %v983 = vsel %vm981, %v978, %v980
        %v985 = vsel %vm159, %v971, 0
        %v987 = vsel %vm163, %v982, 0
        %v989 = vsel %vm163, %v983, 0
        %v991 = vsel %vm163, %v980, 0
        %993 = vmatprep.subr.mxu0 0.0
        %994 = vmatpush1.msra.mxu0 0.0
        %995 = vmatprep.subr.mxu0 0.0
        %996 = vmatpush1.msra.mxu0 0.0
        %997 = vmatprep.subr.mxu0 0.0
        %998 = vmatpush1.msra.mxu0 0.0
        %999 = vmatprep.subr.mxu0 0.0
        %1000 = vmatpush1.msra.mxu0 0.0
        %1001 = vmatprep.subr.mxu0 0.0
        %1002 = vmatpush1.msra.mxu0 0.0
        %1003 = vmatprep.subr.mxu0 0.0
        %1004 = vmatpush1.msra.mxu0 0.0
        %1005 = vmatprep.subr.mxu0 0.0
        %1006 = vmatpush1.msra.mxu0 0.0
        %1007 = vmatprep.subr.mxu0 0.0
        %1008 = vmatpush1.msra.mxu0 0.0
        %1009 = vmatprep.subr.mxu0 0.0
        %1010 = vmatpush1.msra.mxu0 0.0
        %1011 = vmatprep.subr.mxu0 0.0
        %1012 = vmatpush1.msra.mxu0 0.0
        %1013 = vmatprep.subr.mxu0 0.0
        %1014 = vmatpush1.msra.mxu0 0.0
        %1015 = vmatprep.subr.mxu0 0.0
        %1016 = vmatpush1.msra.mxu0 0.0
        %1017 = vmatprep.subr.mxu0 0.0
        %1018 = vmatpush1.msra.mxu0 0.0
        %1019 = vmatprep.subr.mxu0 0.0
        %1020 = vmatpush1.msra.mxu0 0.0
        %1021 = vmatprep.subr.mxu0 0.0
        %1022 = vmatpush1.msra.mxu0 0.0
        %1023 = vmatprep.subr.mxu0 %v989
        %1024 = vmatpush1.msra.mxu0 %v987
        %1025 = vmatprep.subr.mxu0 0.0
        %1026 = vmatpush2.msra.mxu0 0.0
        %1027 = vmatprep.subr.mxu0 0.0
        %1028 = vmatpush2.msra.mxu0 0.0
        %1029 = vmatprep.subr.mxu0 0.0
        %1030 = vmatpush2.msra.mxu0 0.0
        %1031 = vmatprep.subr.mxu0 0.0
        %1032 = vmatpush2.msra.mxu0 0.0
        %1033 = vmatprep.subr.mxu0 0.0
        %1034 = vmatpush2.msra.mxu0 0.0
        %1035 = vmatprep.subr.mxu0 0.0
        %1036 = vmatpush2.msra.mxu0 0.0
        %1037 = vmatprep.subr.mxu0 0.0
        %1038 = vmatpush2.msra.mxu0 0.0
        %1039 = vmatprep.subr.mxu0 0.0
        %1040 = vmatpush2.msra.mxu0 0.0
        %1041 = vmatprep.subr.mxu0 0.0
        %1042 = vmatpush2.msra.mxu0 0.0
        %1043 = vmatprep.subr.mxu0 0.0
        %1044 = vmatpush2.msra.mxu0 0.0
        %1045 = vmatprep.subr.mxu0 0.0
        %1046 = vmatpush2.msra.mxu0 0.0
        %1047 = vmatprep.subr.mxu0 0.0
        %1048 = vmatpush2.msra.mxu0 0.0
        %1049 = vmatprep.subr.mxu0 0.0
        %1050 = vmatpush2.msra.mxu0 0.0
        %1051 = vmatprep.subr.mxu0 0.0
        %1052 = vmatpush2.msra.mxu0 0.0
        %1053 = vmatprep.subr.mxu0 0.0
        %1054 = vmatpush2.msra.mxu0 0.0
        %1055 = vmatprep.subr.mxu0 0.0
        %1056 = vmatpush2.msra.mxu0 0.0
        %1057 = vmatprep.mubr.f32.mxu0 0.0
        %1058 = vmatmul.mubr.f32.gmra.mxu0 %v985
        %v1059 = vpop.f32.mrf.mxu0
        %v1060 = vadd.f32 0.0, %v1059
        %v1061 = vpop.f32.mrf.mxu0
        %v1062 = vadd.f32 0.0, %v1061
        %1063 = vdwg.mxu0
        %1064 = vmatprep.subr.mxu0 0.0
        %1065 = vmatpush1.msra.mxu0 0.0
        %1066 = vmatprep.subr.mxu0 0.0
        %1067 = vmatpush1.msra.mxu0 0.0
        %1068 = vmatprep.subr.mxu0 0.0
        %1069 = vmatpush1.msra.mxu0 0.0
        %1070 = vmatprep.subr.mxu0 0.0
        %1071 = vmatpush1.msra.mxu0 0.0
        %1072 = vmatprep.subr.mxu0 0.0
        %1073 = vmatpush1.msra.mxu0 0.0
        %1074 = vmatprep.subr.mxu0 0.0
        %1075 = vmatpush1.msra.mxu0 0.0
        %1076 = vmatprep.subr.mxu0 0.0
        %1077 = vmatpush1.msra.mxu0 0.0
        %1078 = vmatprep.subr.mxu0 0.0
        %1079 = vmatpush1.msra.mxu0 0.0
        %1080 = vmatprep.subr.mxu0 0.0
        %1081 = vmatpush1.msra.mxu0 0.0
        %1082 = vmatprep.subr.mxu0 0.0
        %1083 = vmatpush1.msra.mxu0 0.0
        %1084 = vmatprep.subr.mxu0 0.0
        %1085 = vmatpush1.msra.mxu0 0.0
        %1086 = vmatprep.subr.mxu0 0.0
        %1087 = vmatpush1.msra.mxu0 0.0
        %1088 = vmatprep.subr.mxu0 0.0
        %1089 = vmatpush1.msra.mxu0 0.0
        %1090 = vmatprep.subr.mxu0 0.0
        %1091 = vmatpush1.msra.mxu0 0.0
        %1092 = vmatprep.subr.mxu0 0.0
        %1093 = vmatpush1.msra.mxu0 0.0
        %1094 = vmatprep.subr.mxu0 0.0
        %1095 = vmatpush1.msra.mxu0 %v991
        %1096 = vmatprep.subr.mxu0 0.0
        %1097 = vmatpush2.msra.mxu0 0.0
        %1098 = vmatprep.subr.mxu0 0.0
        %1099 = vmatpush2.msra.mxu0 0.0
        %1100 = vmatprep.subr.mxu0 0.0
        %1101 = vmatpush2.msra.mxu0 0.0
        %1102 = vmatprep.subr.mxu0 0.0
        %1103 = vmatpush2.msra.mxu0 0.0
        %1104 = vmatprep.subr.mxu0 0.0
        %1105 = vmatpush2.msra.mxu0 0.0
        %1106 = vmatprep.subr.mxu0 0.0
        %1107 = vmatpush2.msra.mxu0 0.0
        %1108 = vmatprep.subr.mxu0 0.0
        %1109 = vmatpush2.msra.mxu0 0.0
        %1110 = vmatprep.subr.mxu0 0.0
        %1111 = vmatpush2.msra.mxu0 0.0
        %1112 = vmatprep.subr.mxu0 0.0
        %1113 = vmatpush2.msra.mxu0 0.0
        %1114 = vmatprep.subr.mxu0 0.0
        %1115 = vmatpush2.msra.mxu0 0.0
        %1116 = vmatprep.subr.mxu0 0.0
        %1117 = vmatpush2.msra.mxu0 0.0
        %1118 = vmatprep.subr.mxu0 0.0
        %1119 = vmatpush2.msra.mxu0 0.0
        %1120 = vmatprep.subr.mxu0 0.0
        %1121 = vmatpush2.msra.mxu0 0.0
        %1122 = vmatprep.subr.mxu0 0.0
        %1123 = vmatpush2.msra.mxu0 0.0
        %1124 = vmatprep.subr.mxu0 0.0
        %1125 = vmatpush2.msra.mxu0 0.0
        %1126 = vmatprep.subr.mxu0 0.0
        %1127 = vmatpush2.msra.mxu0 0.0
        %1128 = vmatprep.mubr.f32.mxu0 0.0
        %1129 = vmatmul.mubr.f32.gmra.mxu0 %v985
        %v1130 = vpop.f32.mrf.mxu0
        %v1131 = vadd.f32 0.0, %v1130
        %v1132 = vpop.f32.mrf.mxu0
        %1133 = vdwg.mxu0
        %v1134 = vadd.f32 %v965, %v1060
        %v1135 = vadd.f32 %v966, %v1062
        %v1136 = vadd.f32 %v967, %v1131
        %v1137 = vld [vmem:[%s141] sm:$0xff]
        %v1138 = vld [vmem:[%s141 + $0x8] sm:$0xff]
        %s1139 = scalar_lea.vmem %s1, 48
        %v1140 = vld [vmem:[%s1139] sm:$0xff]
        %v1143 = vcombine.high %v1137, %v1137
        %v1144 = vcombine.high %v1138, %v1138
        %1145 = vrot.lane.b32.xlu0 %v1137, 48
        %v1146 = vpop.permute.xlu0 %1145
        %1147 = vrot.lane.b32.xlu0 %v1143, 48
        %v1148 = vpop.permute.xlu0 %1147
        %1149 = vrot.lane.b32.xlu0 %v1138, 48
        %v1150 = vpop.permute.xlu0 %1149
        %1151 = vrot.lane.b32.xlu0 %v1144, 48
        %v1152 = vpop.permute.xlu0 %1151
        %vm1153 = vcmask 392192
        %v1154 = vsel %vm1153, %v1146, %v1148
        %v1155 = vsel %vm1153, %v1148, %v1150
        %v1156 = vsel %vm1153, %v1150, %v1152
        %v1158 = vsel %vm159, %v1140, 0
        %v1160 = vsel %vm163, %v1154, 0
        %v1162 = vsel %vm163, %v1155, 0
        %v1164 = vsel %vm163, %v1156, 0
        %1166 = vmatprep.subr.mxu0 0.0
        %1167 = vmatpush1.msra.mxu0 0.0
        %1168 = vmatprep.subr.mxu0 0.0
        %1169 = vmatpush1.msra.mxu0 0.0
        %1170 = vmatprep.subr.mxu0 0.0
        %1171 = vmatpush1.msra.mxu0 0.0
        %1172 = vmatprep.subr.mxu0 0.0
        %1173 = vmatpush1.msra.mxu0 0.0
        %1174 = vmatprep.subr.mxu0 0.0
        %1175 = vmatpush1.msra.mxu0 0.0
        %1176 = vmatprep.subr.mxu0 0.0
        %1177 = vmatpush1.msra.mxu0 0.0
        %1178 = vmatprep.subr.mxu0 0.0
        %1179 = vmatpush1.msra.mxu0 0.0
        %1180 = vmatprep.subr.mxu0 0.0
        %1181 = vmatpush1.msra.mxu0 0.0
        %1182 = vmatprep.subr.mxu0 0.0
        %1183 = vmatpush1.msra.mxu0 0.0
        %1184 = vmatprep.subr.mxu0 0.0
        %1185 = vmatpush1.msra.mxu0 0.0
        %1186 = vmatprep.subr.mxu0 0.0
        %1187 = vmatpush1.msra.mxu0 0.0
        %1188 = vmatprep.subr.mxu0 0.0
        %1189 = vmatpush1.msra.mxu0 0.0
        %1190 = vmatprep.subr.mxu0 0.0
        %1191 = vmatpush1.msra.mxu0 0.0
        %1192 = vmatprep.subr.mxu0 0.0
        %1193 = vmatpush1.msra.mxu0 0.0
        %1194 = vmatprep.subr.mxu0 0.0
        %1195 = vmatpush1.msra.mxu0 0.0
        %1196 = vmatprep.subr.mxu0 %v1162
        %1197 = vmatpush1.msra.mxu0 %v1160
        %1198 = vmatprep.subr.mxu0 0.0
        %1199 = vmatpush2.msra.mxu0 0.0
        %1200 = vmatprep.subr.mxu0 0.0
        %1201 = vmatpush2.msra.mxu0 0.0
        %1202 = vmatprep.subr.mxu0 0.0
        %1203 = vmatpush2.msra.mxu0 0.0
        %1204 = vmatprep.subr.mxu0 0.0
        %1205 = vmatpush2.msra.mxu0 0.0
        %1206 = vmatprep.subr.mxu0 0.0
        %1207 = vmatpush2.msra.mxu0 0.0
        %1208 = vmatprep.subr.mxu0 0.0
        %1209 = vmatpush2.msra.mxu0 0.0
        %1210 = vmatprep.subr.mxu0 0.0
        %1211 = vmatpush2.msra.mxu0 0.0
        %1212 = vmatprep.subr.mxu0 0.0
        %1213 = vmatpush2.msra.mxu0 0.0
        %1214 = vmatprep.subr.mxu0 0.0
        %1215 = vmatpush2.msra.mxu0 0.0
        %1216 = vmatprep.subr.mxu0 0.0
        %1217 = vmatpush2.msra.mxu0 0.0
        %1218 = vmatprep.subr.mxu0 0.0
        %1219 = vmatpush2.msra.mxu0 0.0
        %1220 = vmatprep.subr.mxu0 0.0
        %1221 = vmatpush2.msra.mxu0 0.0
        %1222 = vmatprep.subr.mxu0 0.0
        %1223 = vmatpush2.msra.mxu0 0.0
        %1224 = vmatprep.subr.mxu0 0.0
        %1225 = vmatpush2.msra.mxu0 0.0
        %1226 = vmatprep.subr.mxu0 0.0
        %1227 = vmatpush2.msra.mxu0 0.0
        %1228 = vmatprep.subr.mxu0 0.0
        %1229 = vmatpush2.msra.mxu0 0.0
        %1230 = vmatprep.mubr.f32.mxu0 0.0
        %1231 = vmatmul.mubr.f32.gmra.mxu0 %v1158
        %v1232 = vpop.f32.mrf.mxu0
        %v1233 = vadd.f32 0.0, %v1232
        %v1234 = vpop.f32.mrf.mxu0
        %v1235 = vadd.f32 0.0, %v1234
        %1236 = vdwg.mxu0
        %1237 = vmatprep.subr.mxu0 0.0
        %1238 = vmatpush1.msra.mxu0 0.0
        %1239 = vmatprep.subr.mxu0 0.0
        %1240 = vmatpush1.msra.mxu0 0.0
        %1241 = vmatprep.subr.mxu0 0.0
        %1242 = vmatpush1.msra.mxu0 0.0
        %1243 = vmatprep.subr.mxu0 0.0
        %1244 = vmatpush1.msra.mxu0 0.0
        %1245 = vmatprep.subr.mxu0 0.0
        %1246 = vmatpush1.msra.mxu0 0.0
        %1247 = vmatprep.subr.mxu0 0.0
        %1248 = vmatpush1.msra.mxu0 0.0
        %1249 = vmatprep.subr.mxu0 0.0
        %1250 = vmatpush1.msra.mxu0 0.0
        %1251 = vmatprep.subr.mxu0 0.0
        %1252 = vmatpush1.msra.mxu0 0.0
        %1253 = vmatprep.subr.mxu0 0.0
        %1254 = vmatpush1.msra.mxu0 0.0
        %1255 = vmatprep.subr.mxu0 0.0
        %1256 = vmatpush1.msra.mxu0 0.0
        %1257 = vmatprep.subr.mxu0 0.0
        %1258 = vmatpush1.msra.mxu0 0.0
        %1259 = vmatprep.subr.mxu0 0.0
        %1260 = vmatpush1.msra.mxu0 0.0
        %1261 = vmatprep.subr.mxu0 0.0
        %1262 = vmatpush1.msra.mxu0 0.0
        %1263 = vmatprep.subr.mxu0 0.0
        %1264 = vmatpush1.msra.mxu0 0.0
        %1265 = vmatprep.subr.mxu0 0.0
        %1266 = vmatpush1.msra.mxu0 0.0
        %1267 = vmatprep.subr.mxu0 0.0
        %1268 = vmatpush1.msra.mxu0 %v1164
        %1269 = vmatprep.subr.mxu0 0.0
        %1270 = vmatpush2.msra.mxu0 0.0
        %1271 = vmatprep.subr.mxu0 0.0
        %1272 = vmatpush2.msra.mxu0 0.0
        %1273 = vmatprep.subr.mxu0 0.0
        %1274 = vmatpush2.msra.mxu0 0.0
        %1275 = vmatprep.subr.mxu0 0.0
        %1276 = vmatpush2.msra.mxu0 0.0
        %1277 = vmatprep.subr.mxu0 0.0
        %1278 = vmatpush2.msra.mxu0 0.0
        %1279 = vmatprep.subr.mxu0 0.0
        %1280 = vmatpush2.msra.mxu0 0.0
        %1281 = vmatprep.subr.mxu0 0.0
        %1282 = vmatpush2.msra.mxu0 0.0
        %1283 = vmatprep.subr.mxu0 0.0
        %1284 = vmatpush2.msra.mxu0 0.0
        %1285 = vmatprep.subr.mxu0 0.0
        %1286 = vmatpush2.msra.mxu0 0.0
        %1287 = vmatprep.subr.mxu0 0.0
        %1288 = vmatpush2.msra.mxu0 0.0
        %1289 = vmatprep.subr.mxu0 0.0
        %1290 = vmatpush2.msra.mxu0 0.0
        %1291 = vmatprep.subr.mxu0 0.0
        %1292 = vmatpush2.msra.mxu0 0.0
        %1293 = vmatprep.subr.mxu0 0.0
        %1294 = vmatpush2.msra.mxu0 0.0
        %1295 = vmatprep.subr.mxu0 0.0
        %1296 = vmatpush2.msra.mxu0 0.0
        %1297 = vmatprep.subr.mxu0 0.0
        %1298 = vmatpush2.msra.mxu0 0.0
        %1299 = vmatprep.subr.mxu0 0.0
        %1300 = vmatpush2.msra.mxu0 0.0
        %1301 = vmatprep.mubr.f32.mxu0 0.0
        %1302 = vmatmul.mubr.f32.gmra.mxu0 %v1158
        %v1303 = vpop.f32.mrf.mxu0
        %v1304 = vadd.f32 0.0, %v1303
        %v1305 = vpop.f32.mrf.mxu0
        %1306 = vdwg.mxu0
        %v1307 = vadd.f32 %v1134, %v1233
        %v1308 = vadd.f32 %v1135, %v1235
        %v1309 = vadd.f32 %v1136, %v1304
        %v1310 = vld [vmem:[%s141] sm:$0xff]
        %v1311 = vld [vmem:[%s141 + $0x8] sm:$0xff]
        %s1312 = scalar_lea.vmem %s1, 56
        %v1313 = vld [vmem:[%s1312] sm:$0xff]
        %v1316 = vcombine.high %v1310, %v1310
        %v1317 = vcombine.high %v1311, %v1311
        %1318 = vrot.lane.b32.xlu0 %v1310, 46
        %v1319 = vpop.permute.xlu0 %1318
        %1320 = vrot.lane.b32.xlu0 %v1316, 46
        %v1321 = vpop.permute.xlu0 %1320
        %1322 = vrot.lane.b32.xlu0 %v1311, 46
        %v1323 = vpop.permute.xlu0 %1322
        %1324 = vrot.lane.b32.xlu0 %v1317, 46
        %v1325 = vpop.permute.xlu0 %1324
        %vm1326 = vcmask 375808
        %v1327 = vsel %vm1326, %v1319, %v1321
        %v1328 = vsel %vm1326, %v1321, %v1323
        %v1329 = vsel %vm1326, %v1323, %v1325
        %v1331 = vsel %vm159, %v1313, 0
        %v1333 = vsel %vm163, %v1327, 0
        %v1335 = vsel %vm163, %v1328, 0
        %v1337 = vsel %vm163, %v1329, 0
        %1339 = vmatprep.subr.mxu0 0.0
        %1340 = vmatpush1.msra.mxu0 0.0
        %1341 = vmatprep.subr.mxu0 0.0
        %1342 = vmatpush1.msra.mxu0 0.0
        %1343 = vmatprep.subr.mxu0 0.0
        %1344 = vmatpush1.msra.mxu0 0.0
        %1345 = vmatprep.subr.mxu0 0.0
        %1346 = vmatpush1.msra.mxu0 0.0
        %1347 = vmatprep.subr.mxu0 0.0
        %1348 = vmatpush1.msra.mxu0 0.0
        %1349 = vmatprep.subr.mxu0 0.0
        %1350 = vmatpush1.msra.mxu0 0.0
        %1351 = vmatprep.subr.mxu0 0.0
        %1352 = vmatpush1.msra.mxu0 0.0
        %1353 = vmatprep.subr.mxu0 0.0
        %1354 = vmatpush1.msra.mxu0 0.0
        %1355 = vmatprep.subr.mxu0 0.0
        %1356 = vmatpush1.msra.mxu0 0.0
        %1357 = vmatprep.subr.mxu0 0.0
        %1358 = vmatpush1.msra.mxu0 0.0
        %1359 = vmatprep.subr.mxu0 0.0
        %1360 = vmatpush1.msra.mxu0 0.0
        %1361 = vmatprep.subr.mxu0 0.0
        %1362 = vmatpush1.msra.mxu0 0.0
        %1363 = vmatprep.subr.mxu0 0.0
        %1364 = vmatpush1.msra.mxu0 0.0
        %1365 = vmatprep.subr.mxu0 0.0
        %1366 = vmatpush1.msra.mxu0 0.0
        %1367 = vmatprep.subr.mxu0 0.0
        %1368 = vmatpush1.msra.mxu0 0.0
        %1369 = vmatprep.subr.mxu0 %v1335
        %1370 = vmatpush1.msra.mxu0 %v1333
        %1371 = vmatprep.subr.mxu0 0.0
        %1372 = vmatpush2.msra.mxu0 0.0
        %1373 = vmatprep.subr.mxu0 0.0
        %1374 = vmatpush2.msra.mxu0 0.0
        %1375 = vmatprep.subr.mxu0 0.0
        %1376 = vmatpush2.msra.mxu0 0.0
        %1377 = vmatprep.subr.mxu0 0.0
        %1378 = vmatpush2.msra.mxu0 0.0
        %1379 = vmatprep.subr.mxu0 0.0
        %1380 = vmatpush2.msra.mxu0 0.0
        %1381 = vmatprep.subr.mxu0 0.0
        %1382 = vmatpush2.msra.mxu0 0.0
        %1383 = vmatprep.subr.mxu0 0.0
        %1384 = vmatpush2.msra.mxu0 0.0
        %1385 = vmatprep.subr.mxu0 0.0
        %1386 = vmatpush2.msra.mxu0 0.0
        %1387 = vmatprep.subr.mxu0 0.0
        %1388 = vmatpush2.msra.mxu0 0.0
        %1389 = vmatprep.subr.mxu0 0.0
        %1390 = vmatpush2.msra.mxu0 0.0
        %1391 = vmatprep.subr.mxu0 0.0
        %1392 = vmatpush2.msra.mxu0 0.0
        %1393 = vmatprep.subr.mxu0 0.0
        %1394 = vmatpush2.msra.mxu0 0.0
        %1395 = vmatprep.subr.mxu0 0.0
        %1396 = vmatpush2.msra.mxu0 0.0
        %1397 = vmatprep.subr.mxu0 0.0
        %1398 = vmatpush2.msra.mxu0 0.0
        %1399 = vmatprep.subr.mxu0 0.0
        %1400 = vmatpush2.msra.mxu0 0.0
        %1401 = vmatprep.subr.mxu0 0.0
        %1402 = vmatpush2.msra.mxu0 0.0
        %1403 = vmatprep.mubr.f32.mxu0 0.0
        %1404 = vmatmul.mubr.f32.gmra.mxu0 %v1331
        %v1405 = vpop.f32.mrf.mxu0
        %v1406 = vadd.f32 0.0, %v1405
        %v1407 = vpop.f32.mrf.mxu0
        %v1408 = vadd.f32 0.0, %v1407
        %1409 = vdwg.mxu0
        %1410 = vmatprep.subr.mxu0 0.0
        %1411 = vmatpush1.msra.mxu0 0.0
        %1412 = vmatprep.subr.mxu0 0.0
        %1413 = vmatpush1.msra.mxu0 0.0
        %1414 = vmatprep.subr.mxu0 0.0
        %1415 = vmatpush1.msra.mxu0 0.0
        %1416 = vmatprep.subr.mxu0 0.0
        %1417 = vmatpush1.msra.mxu0 0.0
        %1418 = vmatprep.subr.mxu0 0.0
        %1419 = vmatpush1.msra.mxu0 0.0
        %1420 = vmatprep.subr.mxu0 0.0
        %1421 = vmatpush1.msra.mxu0 0.0
        %1422 = vmatprep.subr.mxu0 0.0
        %1423 = vmatpush1.msra.mxu0 0.0
        %1424 = vmatprep.subr.mxu0 0.0
        %1425 = vmatpush1.msra.mxu0 0.0
        %1426 = vmatprep.subr.mxu0 0.0
        %1427 = vmatpush1.msra.mxu0 0.0
        %1428 = vmatprep.subr.mxu0 0.0
        %1429 = vmatpush1.msra.mxu0 0.0
        %1430 = vmatprep.subr.mxu0 0.0
        %1431 = vmatpush1.msra.mxu0 0.0
        %1432 = vmatprep.subr.mxu0 0.0
        %1433 = vmatpush1.msra.mxu0 0.0
        %1434 = vmatprep.subr.mxu0 0.0
        %1435 = vmatpush1.msra.mxu0 0.0
        %1436 = vmatprep.subr.mxu0 0.0
        %1437 = vmatpush1.msra.mxu0 0.0
        %1438 = vmatprep.subr.mxu0 0.0
        %1439 = vmatpush1.msra.mxu0 0.0
        %1440 = vmatprep.subr.mxu0 0.0
        %1441 = vmatpush1.msra.mxu0 %v1337
        %1442 = vmatprep.subr.mxu0 0.0
        %1443 = vmatpush2.msra.mxu0 0.0
        %1444 = vmatprep.subr.mxu0 0.0
        %1445 = vmatpush2.msra.mxu0 0.0
        %1446 = vmatprep.subr.mxu0 0.0
        %1447 = vmatpush2.msra.mxu0 0.0
        %1448 = vmatprep.subr.mxu0 0.0
        %1449 = vmatpush2.msra.mxu0 0.0
        %1450 = vmatprep.subr.mxu0 0.0
        %1451 = vmatpush2.msra.mxu0 0.0
        %1452 = vmatprep.subr.mxu0 0.0
        %1453 = vmatpush2.msra.mxu0 0.0
        %1454 = vmatprep.subr.mxu0 0.0
        %1455 = vmatpush2.msra.mxu0 0.0
        %1456 = vmatprep.subr.mxu0 0.0
        %1457 = vmatpush2.msra.mxu0 0.0
        %1458 = vmatprep.subr.mxu0 0.0
        %1459 = vmatpush2.msra.mxu0 0.0
        %1460 = vmatprep.subr.mxu0 0.0
        %1461 = vmatpush2.msra.mxu0 0.0
        %1462 = vmatprep.subr.mxu0 0.0
        %1463 = vmatpush2.msra.mxu0 0.0
        %1464 = vmatprep.subr.mxu0 0.0
        %1465 = vmatpush2.msra.mxu0 0.0
        %1466 = vmatprep.subr.mxu0 0.0
        %1467 = vmatpush2.msra.mxu0 0.0
        %1468 = vmatprep.subr.mxu0 0.0
        %1469 = vmatpush2.msra.mxu0 0.0
        %1470 = vmatprep.subr.mxu0 0.0
        %1471 = vmatpush2.msra.mxu0 0.0
        %1472 = vmatprep.subr.mxu0 0.0
        %1473 = vmatpush2.msra.mxu0 0.0
        %1474 = vmatprep.mubr.f32.mxu0 0.0
        %1475 = vmatmul.mubr.f32.gmra.mxu0 %v1331
        %v1476 = vpop.f32.mrf.mxu0
        %v1477 = vadd.f32 0.0, %v1476
        %v1478 = vpop.f32.mrf.mxu0
        %1479 = vdwg.mxu0
        %v1480 = vadd.f32 %v1307, %v1406
        %v1481 = vadd.f32 %v1308, %v1408
        %v1482 = vadd.f32 %v1309, %v1477
        %v1483 = vld [vmem:[%s141] sm:$0xff]
        %v1484 = vld [vmem:[%s141 + $0x8] sm:$0xff]
        %s1485 = scalar_lea.vmem %s1, 64
        %v1486 = vld [vmem:[%s1485] sm:$0xff]
        %v1489 = vcombine.high %v1483, %v1483
        %v1490 = vcombine.high %v1484, %v1484
        %1491 = vrot.lane.b32.xlu0 %v1483, 44
        %v1492 = vpop.permute.xlu0 %1491
        %1493 = vrot.lane.b32.xlu0 %v1489, 44
        %v1494 = vpop.permute.xlu0 %1493
        %1495 = vrot.lane.b32.xlu0 %v1484, 44
        %v1496 = vpop.permute.xlu0 %1495
        %1497 = vrot.lane.b32.xlu0 %v1490, 44
        %v1498 = vpop.permute.xlu0 %1497
        %vm1499 = vcmask 359424
        %v1500 = vsel %vm1499, %v1492, %v1494
        %v1501 = vsel %vm1499, %v1494, %v1496
        %v1502 = vsel %vm1499, %v1496, %v1498
        %v1504 = vsel %vm159, %v1486, 0
        %v1506 = vsel %vm163, %v1500, 0
        %v1508 = vsel %vm163, %v1501, 0
        %v1510 = vsel %vm163, %v1502, 0
        %1512 = vmatprep.subr.mxu0 0.0
        %1513 = vmatpush1.msra.mxu0 0.0
        %1514 = vmatprep.subr.mxu0 0.0
        %1515 = vmatpush1.msra.mxu0 0.0
        %1516 = vmatprep.subr.mxu0 0.0
        %1517 = vmatpush1.msra.mxu0 0.0
        %1518 = vmatprep.subr.mxu0 0.0
        %1519 = vmatpush1.msra.mxu0 0.0
        %1520 = vmatprep.subr.mxu0 0.0
        %1521 = vmatpush1.msra.mxu0 0.0
        %1522 = vmatprep.subr.mxu0 0.0
        %1523 = vmatpush1.msra.mxu0 0.0
        %1524 = vmatprep.subr.mxu0 0.0
        %1525 = vmatpush1.msra.mxu0 0.0
        %1526 = vmatprep.subr.mxu0 0.0
        %1527 = vmatpush1.msra.mxu0 0.0
        %1528 = vmatprep.subr.mxu0 0.0
        %1529 = vmatpush1.msra.mxu0 0.0
        %1530 = vmatprep.subr.mxu0 0.0
        %1531 = vmatpush1.msra.mxu0 0.0
        %1532 = vmatprep.subr.mxu0 0.0
        %1533 = vmatpush1.msra.mxu0 0.0
        %1534 = vmatprep.subr.mxu0 0.0
        %1535 = vmatpush1.msra.mxu0 0.0
        %1536 = vmatprep.subr.mxu0 0.0
        %1537 = vmatpush1.msra.mxu0 0.0
        %1538 = vmatprep.subr.mxu0 0.0
        %1539 = vmatpush1.msra.mxu0 0.0
        %1540 = vmatprep.subr.mxu0 0.0
        %1541 = vmatpush1.msra.mxu0 0.0
        %1542 = vmatprep.subr.mxu0 %v1508
        %1543 = vmatpush1.msra.mxu0 %v1506
        %1544 = vmatprep.subr.mxu0 0.0
        %1545 = vmatpush2.msra.mxu0 0.0
        %1546 = vmatprep.subr.mxu0 0.0
        %1547 = vmatpush2.msra.mxu0 0.0
        %1548 = vmatprep.subr.mxu0 0.0
        %1549 = vmatpush2.msra.mxu0 0.0
        %1550 = vmatprep.subr.mxu0 0.0
        %1551 = vmatpush2.msra.mxu0 0.0
        %1552 = vmatprep.subr.mxu0 0.0
        %1553 = vmatpush2.msra.mxu0 0.0
        %1554 = vmatprep.subr.mxu0 0.0
        %1555 = vmatpush2.msra.mxu0 0.0
        %1556 = vmatprep.subr.mxu0 0.0
        %1557 = vmatpush2.msra.mxu0 0.0
        %1558 = vmatprep.subr.mxu0 0.0
        %1559 = vmatpush2.msra.mxu0 0.0
        %1560 = vmatprep.subr.mxu0 0.0
        %1561 = vmatpush2.msra.mxu0 0.0
        %1562 = vmatprep.subr.mxu0 0.0
        %1563 = vmatpush2.msra.mxu0 0.0
        %1564 = vmatprep.subr.mxu0 0.0
        %1565 = vmatpush2.msra.mxu0 0.0
        %1566 = vmatprep.subr.mxu0 0.0
        %1567 = vmatpush2.msra.mxu0 0.0
        %1568 = vmatprep.subr.mxu0 0.0
        %1569 = vmatpush2.msra.mxu0 0.0
        %1570 = vmatprep.subr.mxu0 0.0
        %1571 = vmatpush2.msra.mxu0 0.0
        %1572 = vmatprep.subr.mxu0 0.0
        %1573 = vmatpush2.msra.mxu0 0.0
        %1574 = vmatprep.subr.mxu0 0.0
        %1575 = vmatpush2.msra.mxu0 0.0
        %1576 = vmatprep.mubr.f32.mxu0 0.0
        %1577 = vmatmul.mubr.f32.gmra.mxu0 %v1504
        %v1578 = vpop.f32.mrf.mxu0
        %v1579 = vadd.f32 0.0, %v1578
        %v1580 = vpop.f32.mrf.mxu0
        %v1581 = vadd.f32 0.0, %v1580
        %1582 = vdwg.mxu0
        %1583 = vmatprep.subr.mxu0 0.0
        %1584 = vmatpush1.msra.mxu0 0.0
        %1585 = vmatprep.subr.mxu0 0.0
        %1586 = vmatpush1.msra.mxu0 0.0
        %1587 = vmatprep.subr.mxu0 0.0
        %1588 = vmatpush1.msra.mxu0 0.0
        %1589 = vmatprep.subr.mxu0 0.0
        %1590 = vmatpush1.msra.mxu0 0.0
        %1591 = vmatprep.subr.mxu0 0.0
        %1592 = vmatpush1.msra.mxu0 0.0
        %1593 = vmatprep.subr.mxu0 0.0
        %1594 = vmatpush1.msra.mxu0 0.0
        %1595 = vmatprep.subr.mxu0 0.0
        %1596 = vmatpush1.msra.mxu0 0.0
        %1597 = vmatprep.subr.mxu0 0.0
        %1598 = vmatpush1.msra.mxu0 0.0
        %1599 = vmatprep.subr.mxu0 0.0
        %1600 = vmatpush1.msra.mxu0 0.0
        %1601 = vmatprep.subr.mxu0 0.0
        %1602 = vmatpush1.msra.mxu0 0.0
        %1603 = vmatprep.subr.mxu0 0.0
        %1604 = vmatpush1.msra.mxu0 0.0
        %1605 = vmatprep.subr.mxu0 0.0
        %1606 = vmatpush1.msra.mxu0 0.0
        %1607 = vmatprep.subr.mxu0 0.0
        %1608 = vmatpush1.msra.mxu0 0.0
        %1609 = vmatprep.subr.mxu0 0.0
        %1610 = vmatpush1.msra.mxu0 0.0
        %1611 = vmatprep.subr.mxu0 0.0
        %1612 = vmatpush1.msra.mxu0 0.0
        %1613 = vmatprep.subr.mxu0 0.0
        %1614 = vmatpush1.msra.mxu0 %v1510
        %1615 = vmatprep.subr.mxu0 0.0
        %1616 = vmatpush2.msra.mxu0 0.0
        %1617 = vmatprep.subr.mxu0 0.0
        %1618 = vmatpush2.msra.mxu0 0.0
        %1619 = vmatprep.subr.mxu0 0.0
        %1620 = vmatpush2.msra.mxu0 0.0
        %1621 = vmatprep.subr.mxu0 0.0
        %1622 = vmatpush2.msra.mxu0 0.0
        %1623 = vmatprep.subr.mxu0 0.0
        %1624 = vmatpush2.msra.mxu0 0.0
        %1625 = vmatprep.subr.mxu0 0.0
        %1626 = vmatpush2.msra.mxu0 0.0
        %1627 = vmatprep.subr.mxu0 0.0
        %1628 = vmatpush2.msra.mxu0 0.0
        %1629 = vmatprep.subr.mxu0 0.0
        %1630 = vmatpush2.msra.mxu0 0.0
        %1631 = vmatprep.subr.mxu0 0.0
        %1632 = vmatpush2.msra.mxu0 0.0
        %1633 = vmatprep.subr.mxu0 0.0
        %1634 = vmatpush2.msra.mxu0 0.0
        %1635 = vmatprep.subr.mxu0 0.0
        %1636 = vmatpush2.msra.mxu0 0.0
        %1637 = vmatprep.subr.mxu0 0.0
        %1638 = vmatpush2.msra.mxu0 0.0
        %1639 = vmatprep.subr.mxu0 0.0
        %1640 = vmatpush2.msra.mxu0 0.0
        %1641 = vmatprep.subr.mxu0 0.0
        %1642 = vmatpush2.msra.mxu0 0.0
        %1643 = vmatprep.subr.mxu0 0.0
        %1644 = vmatpush2.msra.mxu0 0.0
        %1645 = vmatprep.subr.mxu0 0.0
        %1646 = vmatpush2.msra.mxu0 0.0
        %1647 = vmatprep.mubr.f32.mxu0 0.0
        %1648 = vmatmul.mubr.f32.gmra.mxu0 %v1504
        %v1649 = vpop.f32.mrf.mxu0
        %v1650 = vadd.f32 0.0, %v1649
        %v1651 = vpop.f32.mrf.mxu0
        %1652 = vdwg.mxu0
        %v1653 = vadd.f32 %v1480, %v1579
        %v1654 = vadd.f32 %v1481, %v1581
        %v1655 = vadd.f32 %v1482, %v1650
        %1657 = vrot.lane.b32.xlu0 %v1653, 108
        %v1658 = vpop.permute.xlu0 %1657
        %1660 = vrot.lane.b32.xlu0 %v1653, 88
        %v1661 = vpop.permute.xlu0 %1660
        %1663 = vrot.lane.b32.xlu0 %v1653, 68
        %v1664 = vpop.permute.xlu0 %1663
        %1666 = vrot.lane.b32.xlu0 %v1653, 48
        %v1667 = vpop.permute.xlu0 %1666
        %1669 = vrot.lane.b32.xlu0 %v1653, 28
        %v1670 = vpop.permute.xlu0 %1669
        %1673 = vrot.lane.b32.xlu0 %v1653, 8
        %v1674 = vpop.permute.xlu0 %1673
        %1675 = vrot.lane.b32.xlu0 %v1654, 8
        %v1676 = vpop.permute.xlu0 %1675
        %vm1677 = vcmask 64512
        %v1678 = vsel %vm1677, %v1674, %v1676
        %1680 = vrot.lane.b32.xlu0 %v1654, 116
        %v1681 = vpop.permute.xlu0 %1680
        %1683 = vrot.lane.b32.xlu0 %v1654, 96
        %v1684 = vpop.permute.xlu0 %1683
        %1686 = vrot.lane.b32.xlu0 %v1654, 76
        %v1687 = vpop.permute.xlu0 %1686
        %1689 = vrot.lane.b32.xlu0 %v1654, 56
        %v1690 = vpop.permute.xlu0 %1689
        %1692 = vrot.lane.b32.xlu0 %v1654, 36
        %v1693 = vpop.permute.xlu0 %1692
        %1696 = vrot.lane.b32.xlu0 %v1654, 16
        %v1697 = vpop.permute.xlu0 %1696
        %1698 = vrot.lane.b32.xlu0 %v1655, 16
        %v1699 = vpop.permute.xlu0 %1698
        %vm1700 = vcmask 130048
        %v1701 = vsel %vm1700, %v1697, %v1699
        %1703 = vrot.lane.b32.xlu0 %v1655, 124
        %v1704 = vpop.permute.xlu0 %1703
        %1706 = vrot.lane.b32.xlu0 %v1655, 104
        %v1707 = vpop.permute.xlu0 %1706
        %1709 = vrot.lane.b32.xlu0 %v1655, 84
        %v1710 = vpop.permute.xlu0 %1709
        %v1712 = vcombine.low %v1653, %v1661
        %v1713 = vcombine.high %v1653, %v1661
        %v1715 = vunpack.c.l.s4 1983009808
        %v1716 = vunpack.c.0.s8 %v1715
        %v1717 = vlaneseq
        %v1718 = vshrl.u32 %v1717, 7
        %v1719 = vsub.s32 %v1716, %v1718
        %v1720 = vrot.slane %v1712, %v1719
        %v1722 = vunpack.c.l.s4 1983009808
        %v1723 = vunpack.c.0.s8 %v1722
        %v1724 = vlaneseq
        %v1725 = vshrl.u32 %v1724, 7
        %v1726 = vsub.s32 %v1723, %v1725
        %v1727 = vrot.slane %v1713, %v1726
        %v1728 = vcombine.low %v1658, %v1664
        %v1729 = vcombine.high %v1658, %v1664
        %v1731 = vunpack.c.l.s4 1983009808
        %v1732 = vunpack.c.0.s8 %v1731
        %v1733 = vlaneseq
        %v1734 = vshrl.u32 %v1733, 7
        %v1735 = vsub.s32 %v1732, %v1734
        %v1736 = vrot.slane %v1728, %v1735
        %v1738 = vunpack.c.l.s4 1983009808
        %v1739 = vunpack.c.0.s8 %v1738
        %v1740 = vlaneseq
        %v1741 = vshrl.u32 %v1740, 7
        %v1742 = vsub.s32 %v1739, %v1741
        %v1743 = vrot.slane %v1729, %v1742
        %v1744 = vcombine.low %v1667, %v1678
        %v1745 = vcombine.high %v1667, %v1678
        %v1747 = vunpack.c.l.s4 1983009808
        %v1748 = vunpack.c.0.s8 %v1747
        %v1749 = vlaneseq
        %v1750 = vshrl.u32 %v1749, 7
        %v1751 = vsub.s32 %v1748, %v1750
        %v1752 = vrot.slane %v1744, %v1751
        %v1754 = vunpack.c.l.s4 1983009808
        %v1755 = vunpack.c.0.s8 %v1754
        %v1756 = vlaneseq
        %v1757 = vshrl.u32 %v1756, 7
        %v1758 = vsub.s32 %v1755, %v1757
        %v1759 = vrot.slane %v1745, %v1758
        %v1760 = vcombine.low %v1670, %v1681
        %v1761 = vcombine.high %v1670, %v1681
        %v1763 = vunpack.c.l.s4 1983009808
        %v1764 = vunpack.c.0.s8 %v1763
        %v1765 = vlaneseq
        %v1766 = vshrl.u32 %v1765, 7
        %v1767 = vsub.s32 %v1764, %v1766
        %v1768 = vrot.slane %v1760, %v1767
        %v1770 = vunpack.c.l.s4 1983009808
        %v1771 = vunpack.c.0.s8 %v1770
        %v1772 = vlaneseq
        %v1773 = vshrl.u32 %v1772, 7
        %v1774 = vsub.s32 %v1771, %v1773
        %v1775 = vrot.slane %v1761, %v1774
        %v1776 = vcombine.low %v1720, %v1736
        %v1777 = vcombine.high %v1720, %v1736
        %v1779 = vunpack.c.l.s4 1934713408
        %v1780 = vunpack.c.0.s8 %v1779
        %v1781 = vlaneseq
        %v1782 = vshrl.u32 %v1781, 7
        %v1783 = vsub.s32 %v1780, %v1782
        %v1784 = vrot.slane %v1776, %v1783
        %v1786 = vunpack.c.l.s4 1934713408
        %v1787 = vunpack.c.0.s8 %v1786
        %v1788 = vlaneseq
        %v1789 = vshrl.u32 %v1788, 7
        %v1790 = vsub.s32 %v1787, %v1789
        %v1791 = vrot.slane %v1777, %v1790
        %v1792 = vcombine.low %v1727, %v1743
        %v1793 = vcombine.high %v1727, %v1743
        %v1795 = vunpack.c.l.s4 1934713408
        %v1796 = vunpack.c.0.s8 %v1795
        %v1797 = vlaneseq
        %v1798 = vshrl.u32 %v1797, 7
        %v1799 = vsub.s32 %v1796, %v1798
        %v1800 = vrot.slane %v1792, %v1799
        %v1802 = vunpack.c.l.s4 1934713408
        %v1803 = vunpack.c.0.s8 %v1802
        %v1804 = vlaneseq
        %v1805 = vshrl.u32 %v1804, 7
        %v1806 = vsub.s32 %v1803, %v1805
        %v1807 = vrot.slane %v1793, %v1806
        %v1808 = vcombine.low %v1752, %v1768
        %v1809 = vcombine.high %v1752, %v1768
        %v1811 = vunpack.c.l.s4 1934713408
        %v1812 = vunpack.c.0.s8 %v1811
        %v1813 = vlaneseq
        %v1814 = vshrl.u32 %v1813, 7
        %v1815 = vsub.s32 %v1812, %v1814
        %v1816 = vrot.slane %v1808, %v1815
        %v1818 = vunpack.c.l.s4 1934713408
        %v1819 = vunpack.c.0.s8 %v1818
        %v1820 = vlaneseq
        %v1821 = vshrl.u32 %v1820, 7
        %v1822 = vsub.s32 %v1819, %v1821
        %v1823 = vrot.slane %v1809, %v1822
        %v1824 = vcombine.low %v1759, %v1775
        %v1825 = vcombine.high %v1759, %v1775
        %v1827 = vunpack.c.l.s4 1934713408
        %v1828 = vunpack.c.0.s8 %v1827
        %v1829 = vlaneseq
        %v1830 = vshrl.u32 %v1829, 7
        %v1831 = vsub.s32 %v1828, %v1830
        %v1832 = vrot.slane %v1824, %v1831
        %v1834 = vunpack.c.l.s4 1934713408
        %v1835 = vunpack.c.0.s8 %v1834
        %v1836 = vlaneseq
        %v1837 = vshrl.u32 %v1836, 7
        %v1838 = vsub.s32 %v1835, %v1837
        %v1839 = vrot.slane %v1825, %v1838
        %v1840 = vcombine.low %v1784, %v1816
        %v1841 = vcombine.high %v1784, %v1816
        %v1842 = vcombine.low %v1791, %v1823
        %v1843 = vcombine.high %v1791, %v1823
        %v1844 = vcombine.low %v1800, %v1832
        %v1845 = vcombine.high %v1800, %v1832
        %v1846 = vcombine.low %v1807, %v1839
        %v1847 = vcombine.high %v1807, %v1839
        %v1848 = vcombine.low %v1684, %v1690
        %v1849 = vcombine.high %v1684, %v1690
        %v1851 = vunpack.c.l.s4 1983009808
        %v1852 = vunpack.c.0.s8 %v1851
        %v1853 = vlaneseq
        %v1854 = vshrl.u32 %v1853, 7
        %v1855 = vsub.s32 %v1852, %v1854
        %v1856 = vrot.slane %v1848, %v1855
        %v1858 = vunpack.c.l.s4 1983009808
        %v1859 = vunpack.c.0.s8 %v1858
        %v1860 = vlaneseq
        %v1861 = vshrl.u32 %v1860, 7
        %v1862 = vsub.s32 %v1859, %v1861
        %v1863 = vrot.slane %v1849, %v1862
        %v1864 = vcombine.low %v1687, %v1693
        %v1865 = vcombine.high %v1687, %v1693
        %v1867 = vunpack.c.l.s4 1983009808
        %v1868 = vunpack.c.0.s8 %v1867
        %v1869 = vlaneseq
        %v1870 = vshrl.u32 %v1869, 7
        %v1871 = vsub.s32 %v1868, %v1870
        %v1872 = vrot.slane %v1864, %v1871
        %v1874 = vunpack.c.l.s4 1983009808
        %v1875 = vunpack.c.0.s8 %v1874
        %v1876 = vlaneseq
        %v1877 = vshrl.u32 %v1876, 7
        %v1878 = vsub.s32 %v1875, %v1877
        %v1879 = vrot.slane %v1865, %v1878
        %v1880 = vcombine.low %v1701, %v1707
        %v1881 = vcombine.high %v1701, %v1707
        %v1883 = vunpack.c.l.s4 1983009808
        %v1884 = vunpack.c.0.s8 %v1883
        %v1885 = vlaneseq
        %v1886 = vshrl.u32 %v1885, 7
        %v1887 = vsub.s32 %v1884, %v1886
        %v1888 = vrot.slane %v1880, %v1887
        %v1890 = vunpack.c.l.s4 1983009808
        %v1891 = vunpack.c.0.s8 %v1890
        %v1892 = vlaneseq
        %v1893 = vshrl.u32 %v1892, 7
        %v1894 = vsub.s32 %v1891, %v1893
        %v1895 = vrot.slane %v1881, %v1894
        %v1896 = vcombine.low %v1704, %v1710
        %v1897 = vcombine.high %v1704, %v1710
        %v1899 = vunpack.c.l.s4 1983009808
        %v1900 = vunpack.c.0.s8 %v1899
        %v1901 = vlaneseq
        %v1902 = vshrl.u32 %v1901, 7
        %v1903 = vsub.s32 %v1900, %v1902
        %v1904 = vrot.slane %v1896, %v1903
        %v1906 = vunpack.c.l.s4 1983009808
        %v1907 = vunpack.c.0.s8 %v1906
        %v1908 = vlaneseq
        %v1909 = vshrl.u32 %v1908, 7
        %v1910 = vsub.s32 %v1907, %v1909
        %v1911 = vrot.slane %v1897, %v1910
        %v1912 = vcombine.low %v1856, %v1872
        %v1913 = vcombine.high %v1856, %v1872
        %v1915 = vunpack.c.l.s4 1934713408
        %v1916 = vunpack.c.0.s8 %v1915
        %v1917 = vlaneseq
        %v1918 = vshrl.u32 %v1917, 7
        %v1919 = vsub.s32 %v1916, %v1918
        %v1920 = vrot.slane %v1912, %v1919
        %v1922 = vunpack.c.l.s4 1934713408
        %v1923 = vunpack.c.0.s8 %v1922
        %v1924 = vlaneseq
        %v1925 = vshrl.u32 %v1924, 7
        %v1926 = vsub.s32 %v1923, %v1925
        %v1927 = vrot.slane %v1913, %v1926
        %v1928 = vcombine.low %v1863, %v1879
        %v1929 = vcombine.high %v1863, %v1879
        %v1931 = vunpack.c.l.s4 1934713408
        %v1932 = vunpack.c.0.s8 %v1931
        %v1933 = vlaneseq
        %v1934 = vshrl.u32 %v1933, 7
        %v1935 = vsub.s32 %v1932, %v1934
        %v1936 = vrot.slane %v1928, %v1935
        %v1938 = vunpack.c.l.s4 1934713408
        %v1939 = vunpack.c.0.s8 %v1938
        %v1940 = vlaneseq
        %v1941 = vshrl.u32 %v1940, 7
        %v1942 = vsub.s32 %v1939, %v1941
        %v1943 = vrot.slane %v1929, %v1942
        %v1944 = vcombine.low %v1888, %v1904
        %v1945 = vcombine.high %v1888, %v1904
        %v1947 = vunpack.c.l.s4 1934713408
        %v1948 = vunpack.c.0.s8 %v1947
        %v1949 = vlaneseq
        %v1950 = vshrl.u32 %v1949, 7
        %v1951 = vsub.s32 %v1948, %v1950
        %v1952 = vrot.slane %v1944, %v1951
        %v1954 = vunpack.c.l.s4 1934713408
        %v1955 = vunpack.c.0.s8 %v1954
        %v1956 = vlaneseq
        %v1957 = vshrl.u32 %v1956, 7
        %v1958 = vsub.s32 %v1955, %v1957
        %v1959 = vrot.slane %v1945, %v1958
        %v1960 = vcombine.low %v1895, %v1911
        %v1961 = vcombine.high %v1895, %v1911
        %v1963 = vunpack.c.l.s4 1934713408
        %v1964 = vunpack.c.0.s8 %v1963
        %v1965 = vlaneseq
        %v1966 = vshrl.u32 %v1965, 7
        %v1967 = vsub.s32 %v1964, %v1966
        %v1968 = vrot.slane %v1960, %v1967
        %v1970 = vunpack.c.l.s4 1934713408
        %v1971 = vunpack.c.0.s8 %v1970
        %v1972 = vlaneseq
        %v1973 = vshrl.u32 %v1972, 7
        %v1974 = vsub.s32 %v1971, %v1973
        %v1975 = vrot.slane %v1961, %v1974
        %v1976 = vcombine.low %v1920, %v1952
        %v1977 = vcombine.high %v1920, %v1952
        %v1978 = vcombine.low %v1927, %v1959
        %v1979 = vcombine.high %v1927, %v1959
        %v1980 = vcombine.low %v1936, %v1968
        %v1981 = vcombine.high %v1936, %v1968
        %v1982 = vcombine.low %v1943, %v1975
        %v1983 = vcombine.high %v1943, %v1975
        %v1984 = vcombine.low %v1840, %v1842
        %v1985 = vcombine.high %v1840, %v1842
        %v1987 = vunpack.c.l.s4 1983009808
        %v1988 = vunpack.c.0.s8 %v1987
        %v1989 = vlaneseq
        %v1990 = vshrl.u32 %v1989, 7
        %v1991 = vsub.s32 %v1988, %v1990
        %v1992 = vrot.slane %v1984, %v1991
        %v1994 = vunpack.c.l.s4 1983009808
        %v1995 = vunpack.c.0.s8 %v1994
        %v1996 = vlaneseq
        %v1997 = vshrl.u32 %v1996, 7
        %v1998 = vsub.s32 %v1995, %v1997
        %v1999 = vrot.slane %v1985, %v1998
        %v2000 = vcombine.low %v1841, %v1843
        %v2001 = vcombine.high %v1841, %v1843
        %v2003 = vunpack.c.l.s4 1983009808
        %v2004 = vunpack.c.0.s8 %v2003
        %v2005 = vlaneseq
        %v2006 = vshrl.u32 %v2005, 7
        %v2007 = vsub.s32 %v2004, %v2006
        %v2008 = vrot.slane %v2000, %v2007
        %v2010 = vunpack.c.l.s4 1983009808
        %v2011 = vunpack.c.0.s8 %v2010
        %v2012 = vlaneseq
        %v2013 = vshrl.u32 %v2012, 7
        %v2014 = vsub.s32 %v2011, %v2013
        %v2015 = vrot.slane %v2001, %v2014
        %v2016 = vcombine.low %v1844, %v1846
        %v2017 = vcombine.high %v1844, %v1846
        %v2019 = vunpack.c.l.s4 1983009808
        %v2020 = vunpack.c.0.s8 %v2019
        %v2021 = vlaneseq
        %v2022 = vshrl.u32 %v2021, 7
        %v2023 = vsub.s32 %v2020, %v2022
        %v2024 = vrot.slane %v2016, %v2023
        %v2026 = vunpack.c.l.s4 1983009808
        %v2027 = vunpack.c.0.s8 %v2026
        %v2028 = vlaneseq
        %v2029 = vshrl.u32 %v2028, 7
        %v2030 = vsub.s32 %v2027, %v2029
        %v2031 = vrot.slane %v2017, %v2030
        %v2032 = vcombine.low %v1845, %v1847
        %v2033 = vcombine.high %v1845, %v1847
        %v2035 = vunpack.c.l.s4 1983009808
        %v2036 = vunpack.c.0.s8 %v2035
        %v2037 = vlaneseq
        %v2038 = vshrl.u32 %v2037, 7
        %v2039 = vsub.s32 %v2036, %v2038
        %v2040 = vrot.slane %v2032, %v2039
        %v2042 = vunpack.c.l.s4 1983009808
        %v2043 = vunpack.c.0.s8 %v2042
        %v2044 = vlaneseq
        %v2045 = vshrl.u32 %v2044, 7
        %v2046 = vsub.s32 %v2043, %v2045
        %v2047 = vrot.slane %v2033, %v2046
        %v2048 = vcombine.low %v1992, %v2008
        %v2049 = vcombine.high %v1992, %v2008
        %v2051 = vunpack.c.l.s4 1934713408
        %v2052 = vunpack.c.0.s8 %v2051
        %v2053 = vlaneseq
        %v2054 = vshrl.u32 %v2053, 7
        %v2055 = vsub.s32 %v2052, %v2054
        %v2056 = vrot.slane %v2048, %v2055
        %v2058 = vunpack.c.l.s4 1934713408
        %v2059 = vunpack.c.0.s8 %v2058
        %v2060 = vlaneseq
        %v2061 = vshrl.u32 %v2060, 7
        %v2062 = vsub.s32 %v2059, %v2061
        %v2063 = vrot.slane %v2049, %v2062
        %v2064 = vcombine.low %v1999, %v2015
        %v2065 = vcombine.high %v1999, %v2015
        %v2067 = vunpack.c.l.s4 1934713408
        %v2068 = vunpack.c.0.s8 %v2067
        %v2069 = vlaneseq
        %v2070 = vshrl.u32 %v2069, 7
        %v2071 = vsub.s32 %v2068, %v2070
        %v2072 = vrot.slane %v2064, %v2071
        %v2074 = vunpack.c.l.s4 1934713408
        %v2075 = vunpack.c.0.s8 %v2074
        %v2076 = vlaneseq
        %v2077 = vshrl.u32 %v2076, 7
        %v2078 = vsub.s32 %v2075, %v2077
        %v2079 = vrot.slane %v2065, %v2078
        %v2080 = vcombine.low %v2024, %v2040
        %v2081 = vcombine.high %v2024, %v2040
        %v2083 = vunpack.c.l.s4 1934713408
        %v2084 = vunpack.c.0.s8 %v2083
        %v2085 = vlaneseq
        %v2086 = vshrl.u32 %v2085, 7
        %v2087 = vsub.s32 %v2084, %v2086
        %v2088 = vrot.slane %v2080, %v2087
        %v2090 = vunpack.c.l.s4 1934713408
        %v2091 = vunpack.c.0.s8 %v2090
        %v2092 = vlaneseq
        %v2093 = vshrl.u32 %v2092, 7
        %v2094 = vsub.s32 %v2091, %v2093
        %v2095 = vrot.slane %v2081, %v2094
        %v2096 = vcombine.low %v2031, %v2047
        %v2097 = vcombine.high %v2031, %v2047
        %v2099 = vunpack.c.l.s4 1934713408
        %v2100 = vunpack.c.0.s8 %v2099
        %v2101 = vlaneseq
        %v2102 = vshrl.u32 %v2101, 7
        %v2103 = vsub.s32 %v2100, %v2102
        %v2104 = vrot.slane %v2096, %v2103
        %v2106 = vunpack.c.l.s4 1934713408
        %v2107 = vunpack.c.0.s8 %v2106
        %v2108 = vlaneseq
        %v2109 = vshrl.u32 %v2108, 7
        %v2110 = vsub.s32 %v2107, %v2109
        %v2111 = vrot.slane %v2097, %v2110
        %v2112 = vcombine.low %v2056, %v2088
        %v2113 = vcombine.high %v2056, %v2088
        %v2114 = vcombine.low %v2063, %v2095
        %v2115 = vcombine.high %v2063, %v2095
        %v2116 = vcombine.low %v2072, %v2104
        %v2117 = vcombine.high %v2072, %v2104
        %v2118 = vcombine.low %v2079, %v2111
        %v2119 = vcombine.high %v2079, %v2111
        %v2120 = vcombine.low %v1976, %v1978
        %v2121 = vcombine.high %v1976, %v1978
        %v2123 = vunpack.c.l.s4 1983009808
        %v2124 = vunpack.c.0.s8 %v2123
        %v2125 = vlaneseq
        %v2126 = vshrl.u32 %v2125, 7
        %v2127 = vsub.s32 %v2124, %v2126
        %v2128 = vrot.slane %v2120, %v2127
        %v2130 = vunpack.c.l.s4 1983009808
        %v2131 = vunpack.c.0.s8 %v2130
        %v2132 = vlaneseq
        %v2133 = vshrl.u32 %v2132, 7
        %v2134 = vsub.s32 %v2131, %v2133
        %v2135 = vrot.slane %v2121, %v2134
        %v2136 = vcombine.low %v1977, %v1979
        %v2137 = vcombine.high %v1977, %v1979
        %v2139 = vunpack.c.l.s4 1983009808
        %v2140 = vunpack.c.0.s8 %v2139
        %v2141 = vlaneseq
        %v2142 = vshrl.u32 %v2141, 7
        %v2143 = vsub.s32 %v2140, %v2142
        %v2144 = vrot.slane %v2136, %v2143
        %v2146 = vunpack.c.l.s4 1983009808
        %v2147 = vunpack.c.0.s8 %v2146
        %v2148 = vlaneseq
        %v2149 = vshrl.u32 %v2148, 7
        %v2150 = vsub.s32 %v2147, %v2149
        %v2151 = vrot.slane %v2137, %v2150
        %v2152 = vcombine.low %v1980, %v1982
        %v2153 = vcombine.high %v1980, %v1982
        %v2155 = vunpack.c.l.s4 1983009808
        %v2156 = vunpack.c.0.s8 %v2155
        %v2157 = vlaneseq
        %v2158 = vshrl.u32 %v2157, 7
        %v2159 = vsub.s32 %v2156, %v2158
        %v2160 = vrot.slane %v2152, %v2159
        %v2162 = vunpack.c.l.s4 1983009808
        %v2163 = vunpack.c.0.s8 %v2162
        %v2164 = vlaneseq
        %v2165 = vshrl.u32 %v2164, 7
        %v2166 = vsub.s32 %v2163, %v2165
        %v2167 = vrot.slane %v2153, %v2166
        %v2168 = vcombine.low %v1981, %v1983
        %v2169 = vcombine.high %v1981, %v1983
        %v2171 = vunpack.c.l.s4 1983009808
        %v2172 = vunpack.c.0.s8 %v2171
        %v2173 = vlaneseq
        %v2174 = vshrl.u32 %v2173, 7
        %v2175 = vsub.s32 %v2172, %v2174
        %v2176 = vrot.slane %v2168, %v2175
        %v2178 = vunpack.c.l.s4 1983009808
        %v2179 = vunpack.c.0.s8 %v2178
        %v2180 = vlaneseq
        %v2181 = vshrl.u32 %v2180, 7
        %v2182 = vsub.s32 %v2179, %v2181
        %v2183 = vrot.slane %v2169, %v2182
        %v2184 = vcombine.low %v2128, %v2144
        %v2185 = vcombine.high %v2128, %v2144
        %v2187 = vunpack.c.l.s4 1934713408
        %v2188 = vunpack.c.0.s8 %v2187
        %v2189 = vlaneseq
        %v2190 = vshrl.u32 %v2189, 7
        %v2191 = vsub.s32 %v2188, %v2190
        %v2192 = vrot.slane %v2184, %v2191
        %v2194 = vunpack.c.l.s4 1934713408
        %v2195 = vunpack.c.0.s8 %v2194
        %v2196 = vlaneseq
        %v2197 = vshrl.u32 %v2196, 7
        %v2198 = vsub.s32 %v2195, %v2197
        %v2199 = vrot.slane %v2185, %v2198
        %v2200 = vcombine.low %v2135, %v2151
        %v2201 = vcombine.high %v2135, %v2151
        %v2203 = vunpack.c.l.s4 1934713408
        %v2204 = vunpack.c.0.s8 %v2203
        %v2205 = vlaneseq
        %v2206 = vshrl.u32 %v2205, 7
        %v2207 = vsub.s32 %v2204, %v2206
        %v2208 = vrot.slane %v2200, %v2207
        %v2210 = vunpack.c.l.s4 1934713408
        %v2211 = vunpack.c.0.s8 %v2210
        %v2212 = vlaneseq
        %v2213 = vshrl.u32 %v2212, 7
        %v2214 = vsub.s32 %v2211, %v2213
        %v2215 = vrot.slane %v2201, %v2214
        %v2216 = vcombine.low %v2160, %v2176
        %v2217 = vcombine.high %v2160, %v2176
        %v2219 = vunpack.c.l.s4 1934713408
        %v2220 = vunpack.c.0.s8 %v2219
        %v2221 = vlaneseq
        %v2222 = vshrl.u32 %v2221, 7
        %v2223 = vsub.s32 %v2220, %v2222
        %v2224 = vrot.slane %v2216, %v2223
        %v2226 = vunpack.c.l.s4 1934713408
        %v2227 = vunpack.c.0.s8 %v2226
        %v2228 = vlaneseq
        %v2229 = vshrl.u32 %v2228, 7
        %v2230 = vsub.s32 %v2227, %v2229
        %v2231 = vrot.slane %v2217, %v2230
        %v2232 = vcombine.low %v2167, %v2183
        %v2233 = vcombine.high %v2167, %v2183
        %v2235 = vunpack.c.l.s4 1934713408
        %v2236 = vunpack.c.0.s8 %v2235
        %v2237 = vlaneseq
        %v2238 = vshrl.u32 %v2237, 7
        %v2239 = vsub.s32 %v2236, %v2238
        %v2240 = vrot.slane %v2232, %v2239
        %v2242 = vunpack.c.l.s4 1934713408
        %v2243 = vunpack.c.0.s8 %v2242
        %v2244 = vlaneseq
        %v2245 = vshrl.u32 %v2244, 7
        %v2246 = vsub.s32 %v2243, %v2245
        %v2247 = vrot.slane %v2233, %v2246
        %v2248 = vcombine.low %v2192, %v2224
        %v2249 = vcombine.high %v2192, %v2224
        %v2250 = vcombine.low %v2199, %v2231
        %v2251 = vcombine.high %v2199, %v2231
        %v2252 = vcombine.low %v2208, %v2240
        %v2253 = vcombine.high %v2208, %v2240
        %v2254 = vcombine.low %v2215, %v2247
        %v2255 = vcombine.high %v2215, %v2247
        %2257 = vrot.lane.b32.xlu0 %v2113, 16
        %v2258 = vpop.permute.xlu0 %2257
        %2261 = vrot.lane.b32.xlu0 %v2114, 32
        %v2262 = vpop.permute.xlu0 %2261
        %2265 = vrot.lane.b32.xlu0 %v2115, 48
        %v2266 = vpop.permute.xlu0 %2265
        %2269 = vrot.lane.b32.xlu0 %v2116, 64
        %v2270 = vpop.permute.xlu0 %2269
        %2273 = vrot.lane.b32.xlu0 %v2117, 80
        %v2274 = vpop.permute.xlu0 %2273
        %2277 = vrot.lane.b32.xlu0 %v2118, 96
        %v2278 = vpop.permute.xlu0 %2277
        %2281 = vrot.lane.b32.xlu0 %v2119, 112
        %v2282 = vpop.permute.xlu0 %2281
        %2285 = vrot.lane.b32.xlu0 %v2249, 16
        %v2286 = vpop.permute.xlu0 %2285
        %2289 = vrot.lane.b32.xlu0 %v2250, 32
        %v2290 = vpop.permute.xlu0 %2289
        %2293 = vrot.lane.b32.xlu0 %v2251, 48
        %v2294 = vpop.permute.xlu0 %2293
        %2297 = vrot.lane.b32.xlu0 %v2252, 64
        %v2298 = vpop.permute.xlu0 %2297
        %2301 = vrot.lane.b32.xlu0 %v2253, 80
        %v2302 = vpop.permute.xlu0 %2301
        %2305 = vrot.lane.b32.xlu0 %v2254, 96
        %v2306 = vpop.permute.xlu0 %2305
        %2309 = vrot.lane.b32.xlu0 %v2255, 112
        %v2310 = vpop.permute.xlu0 %2309
        %v2312 = vsel %vm1700, %v2112, %v2258
        %vm2313 = vcmask 261120
        %v2314 = vsel %vm2313, %v2312, %v2262
        %v2315 = vsel %vm1153, %v2314, %v2266
        %vm2316 = vcmask 523264
        %v2317 = vsel %vm2316, %v2315, %v2270
        %vm2318 = vcmask 654336
        %v2319 = vsel %vm2318, %v2317, %v2274
        %vm2320 = vcmask 785408
        %v2321 = vsel %vm2320, %v2319, %v2278
        %vm2322 = vcmask 916480
        %v2323 = vsel %vm2322, %v2321, %v2282
        %v2324 = vsel %vm1700, %v2248, %v2286
        %v2325 = vsel %vm2313, %v2324, %v2290
        %v2326 = vsel %vm1153, %v2325, %v2294
        %v2327 = vsel %vm2316, %v2326, %v2298
        %v2328 = vsel %vm2318, %v2327, %v2302
        %v2329 = vsel %vm2320, %v2328, %v2306
        %v2330 = vsel %vm2322, %v2329, %v2310
        %2331 = vst [vmem:[%s136] sm:$0xff] %v2323
        %2332 = vst [vmem:[%s136 + $0x8] sm:$0xff] %v2330
        %s2333 = sand.u32 %s71, 1
        %s2334 = scalar_lea.sflag [#allocation3], %s2333
        %s2335 = sand.u32 %s71, 1
        %s2336 = smul.addr %s2335, 16
        %s2337 = scalar_lea.vmem [#allocation2], %s2336
        // Predicated region
        $region29: #{tpu_custom_call.1} parent=27 // pred_check
          %p2338 = pneg %p81
        $region30: #{tpu_custom_call.1} parent=27 // pred_check_branch
          %2340 = sbr.rel (%p2338) target = $region32
        $region31: #{tpu_custom_call.1} parent=27 // pred_region
          %s2342 = ssub.s32 256, 256
          %2343 = vsyncadd %s2334, %s2342
          %s2344 = smul.addr %s16, 2
          %s2345 = smul.addr %s2344, 128
          %s2346 = scalar_lea.hbm %s2, %s2345
          %s2348 = sshll.u32 %s2337, 4
          %s2349 = int_to_ptr.vmem [resolvable:$true] %s2348
          %2351 = dma.vmem_to_hbm [thread:$0]  %s2349, 256, %s2346, %s2334
        $region32: #{tpu_custom_call.1} parent=27 // pred_fallthru
          _
      $region28: #{tpu_custom_call.1} parent=5 // pred_fallthru
        _
      %p2352 = scmp.le.s32.totalorder 2, %s11
      // Predicated region
      $region33: #{tpu_custom_call.1} parent=5 // pred_check
        %p2353 = pneg %p2352
      $region34: #{tpu_custom_call.1} parent=5 // pred_check_branch
        %2355 = sbr.rel (%p2353) target = $region36
      $region35: #{tpu_custom_call.1} parent=5 // pred_region
        %s2356 = ssub.s32 %s11, 2
        // Predicated region
        $region37: #{tpu_custom_call.1} parent=35 // pred_check
          %p2357 = pneg %p87
        $region38: #{tpu_custom_call.1} parent=35 // pred_check_branch
          %2359 = sbr.rel (%p2357) target = $region40
        $region39: #{tpu_custom_call.1} parent=35 // pred_region
          %s2360 = sand.u32 %s72, 1
          %s2361 = scalar_lea.sflag [#allocation3], %s2360
          %s2362 = sand.u32 %s72, 1
          %s2363 = smul.addr %s2362, 16
          %s2364 = scalar_lea.vmem [#allocation2], %s2363
          %2365 = dma.done %s2361, 256
        $region40: #{tpu_custom_call.1} parent=35 // pred_fallthru
          _
      $region36: #{tpu_custom_call.1} parent=5 // pred_fallthru
        _
    $region6: #{tpu_custom_call.1} parent=1 // loop_footer
      %s15 = sadd.s32 1, %s11
    $region7: #{tpu_custom_call.1} parent=1 // loop_footer_branch
      %10 = sbr.rel target = $region3
    $region8: #{tpu_custom_call.1} parent=1 // loop_exit
      _
    %2366 = vsyncpa [#allocation3], 1
    %s2367 = scalar_lea.sflag [#allocation3], 1
    %2368 = vsyncpa %s2367, 1

</llo_original>
